<compile_context>
chip_gen: v7x
topology: tpu7x:2x2x1
jax: 0.10.0
libtpu: 0.0.40
codegen_flags: <defaults>
</compile_context>

<pallas_src>
import functools

import jax
import jax.numpy as jnp
from jax.experimental import pallas as pl
from jax.experimental.pallas import tpu as pltpu


def _vmem_spec():
    # Whole-array block, resident in VMEM for the single kernel invocation.
    return pl.BlockSpec(memory_space=pltpu.MemorySpace.VMEM)


def _compiler_params():
    # Explicit scoped-VMEM budget (v5e default is only 16 MiB; v7x has 64 MiB
    # physical).  Actual residency at B=2 is well under 1 MiB.
    return pltpu.CompilerParams(vmem_limit_bytes=32 * 1024 * 1024)


# --------------------------- Pallas kernels ---------------------------------

def _conv1_block_kernel(p1_ref, w1_ref, b1_ref, s1_ref, *, T, tau, axon_tau):
    """conv1 (single stacked matmul) -> 2x2 maxpool -> bias -> LIF over T.

    Lane-dense layout: channels in sublanes, batch*positions in lanes.
      p1_ref : (K1, 4*M1)   bf16  pool-offset im2col patches, col = q*M1 + m
      w1_ref : (C1, K1)     bf16
      b1_ref : (C1, 1)      f32
      s1_ref : (T, C1, M1)  bf16  spikes, m = b*144 + h*12 + w
    """
    m1 = s1_ref.shape[2]
    z = jnp.dot(w1_ref[...], p1_ref[...],
                preferred_element_type=jnp.float32)          # (C1, 4*M1)
    cur = z[:, 0:m1]
    for q in range(1, 4):                                    # max over pool window
        cur = jnp.maximum(cur, z[:, q * m1:(q + 1) * m1])
    cur = cur + b1_ref[...]            # bias after max == max after bias

    axon_decay = 1.0 - 1.0 / axon_tau
    inv_tau = 1.0 / tau
    i_state = jnp.zeros_like(cur)
    v_state = jnp.zeros_like(cur)
    for t in range(T):                 # T small -> unrolled; state stays in vregs
        i_state = i_state * axon_decay + cur                 # axon (synaptic) filter
        v_state = v_state + (i_state - v_state) * inv_tau    # leaky integration
        fired = v_state >= 1.0
        s1_ref[t, :, :] = fired.astype(s1_ref.dtype)         # lane-dense spike store
        v_state = jnp.where(fired, 0.0, v_state)             # hard reset


def _conv2_classifier_kernel(p2_ref, w2_ref, b2_ref, wf_ref, bfc_ref, out_ref,
                             fc_buf, *, T, tau, axon_tau, batch):
    """conv2 (one matmul for all T and pool offsets) -> maxpool -> bias -> LIF,
    fused with the classifier (batched FC over all T -> LIF -> mean over T).
    conv_2 spikes never leave VMEM.

      p2_ref : (K2, T*4*M2)    bf16  col = t*4*M2 + q*M2 + (b*16 + oh*4 + ow)
      w2_ref : (C2, K2)        bf16
      b2_ref : (C2, 1)         f32
      wf_ref : (C2*16, 10)     bf16  row = c*16 + oh*4 + ow (NCHW flatten order)
      bfc_ref: (1, 10)         f32
      out_ref: (batch, 10)     f32   logits (mean of classifier spikes over T)
      fc_buf : (T*batch, C2*16) f32  VMEM scratch holding the FC input rows
    """
    c2 = w2_ref.shape[0]
    m2 = batch * 16
    z = jnp.dot(w2_ref[...], p2_ref[...],
                preferred_element_type=jnp.float32)          # (C2, T*4*M2)

    axon_decay = 1.0 - 1.0 / axon_tau
    inv_tau = 1.0 / tau
    i_state = jnp.zeros((c2, m2), jnp.float32)
    v_state = jnp.zeros((c2, m2), jnp.float32)
    for t in range(T):
        zt = z[:, t * 4 * m2:(t + 1) * 4 * m2]               # 128-aligned slice
        cur = zt[:, 0:m2]
        for q in range(1, 4):
            cur = jnp.maximum(cur, zt[:, q * m2:(q + 1) * m2])
        cur = cur + b2_ref[...]
        i_state = i_state * axon_decay + cur
        v_state = v_state + (i_state - v_state) * inv_tau
        fired = v_state >= 1.0
        spk = fired.astype(jnp.float32)                      # (C2, M2) 0/1
        v_state = jnp.where(fired, 0.0, v_state)
        # Re-layout spikes (channels-in-sublanes) into NCHW-flattened FC rows
        # with small static slice copies (T*batch*C2 = 64 one-time stores).
        # TODO(synk): for large batch replace this with a batch-tiled grid
        # (parallel axis -> v7x megacore) instead of the static scatter.
        for c in range(c2):
            row = spk[c:c + 1, :]                            # (1, batch*16)
            for b in range(batch):
                fc_buf[t * batch + b:t * batch + b + 1,
                       c * 16:(c + 1) * 16] = row[:, b * 16:(b + 1) * 16]

    # Classifier: one batched (T*B, 128) @ (128, 10) FC, then LIF + mean over T.
    fc = jnp.dot(fc_buf[...].astype(wf_ref.dtype), wf_ref[...],
                 preferred_element_type=jnp.float32) + bfc_ref[...]
    n_out = out_ref.shape[1]
    v3 = jnp.zeros((batch, n_out), jnp.float32)
    acc = jnp.zeros((batch, n_out), jnp.float32)
    for t in range(T):
        cur = fc[t * batch:(t + 1) * batch, :]
        v3 = v3 + (cur - v3) * inv_tau
        fired = v3 >= 1.0
        acc = acc + fired.astype(jnp.float32)
        v3 = jnp.where(fired, 0.0, v3)
    out_ref[...] = acc * (1.0 / T)                           # == x.mean(dim=1)


# --------------------------- kernel wrappers ---------------------------------

def conv1_block(p1, w1t, b1, *, T, tau, axon_tau):
    k1, four_m1 = p1.shape
    del k1
    m1 = four_m1 // 4
    c1 = w1t.shape[0]
    kern = functools.partial(_conv1_block_kernel, T=T, tau=tau, axon_tau=axon_tau)
    return pl.pallas_call(
        kern,
        out_shape=jax.ShapeDtypeStruct((T, c1, m1), jnp.bfloat16),
        in_specs=[_vmem_spec(), _vmem_spec(), _vmem_spec()],
        out_specs=_vmem_spec(),
        compiler_params=_compiler_params(),
    )(p1, w1t, b1)


def conv2_classifier_block(p2, w2t, b2, wf_mat, bfc, *, T, tau, axon_tau, batch):
    f_in, n_out = wf_mat.shape
    kern = functools.partial(_conv2_classifier_kernel, T=T, tau=tau,
                             axon_tau=axon_tau, batch=batch)
    return pl.pallas_call(
        kern,
        out_shape=jax.ShapeDtypeStruct((batch, n_out), jnp.float32),
        in_specs=[_vmem_spec()] * 5,
        out_specs=_vmem_spec(),
        scratch_shapes=[pltpu.VMEM((T * batch, f_in), jnp.float32)],
        compiler_params=_compiler_params(),
    )(p2, w2t, b2, wf_mat, bfc)


# ------------------------------ JAX glue -------------------------------------

def init_params(key, channels):
    """Deterministic synthetic parameters matching the module's shapes."""
    C1, C2 = channels, 2 * channels
    ks = jax.random.split(key, 6)

    def u(k, shape, fan_in):
        bound = 1.0 / jnp.sqrt(jnp.float32(fan_in))
        return jax.random.uniform(k, shape, jnp.float32, -bound, bound)

    fin = C2 * 4 * 4
    return dict(
        w1=u(ks[0], (C1, 1, 5, 5), 1 * 25),   b1=u(ks[1], (C1,), 1 * 25),
        w2=u(ks[2], (C2, C1, 5, 5), C1 * 25), b2=u(ks[3], (C2,), C1 * 25),
        wf=u(ks[4], (10, fin), fin),          bf=u(ks[5], (10,), fin),
    )


def casddtp_csnn_forward(params, x_nchw, labels, *, T, tau, axon_tau):
    B = x_nchw.shape[0]
    C1 = params["w1"].shape[0]
    C2 = params["w2"].shape[0]
    cdt = jnp.bfloat16          # MXU-native operand width; spikes (0/1) exact.

    # ---- conv_1 patches (time-invariant: input identical at every t) --------
    # p1[ki*5+kj, q*M1 + b*144 + h*12 + w] = x[b, 2h+dy+ki, 2w+dx+kj]
    x2d = x_nchw[:, 0].astype(cdt)                            # (B, 28, 28)
    shift1 = jnp.stack([x2d[:, ki:ki + 24, kj:kj + 24]
                        for ki in range(5) for kj in range(5)], axis=0)
    p1 = jnp.stack([shift1[:, :, dy::2, dx::2]
                    for dy in (0, 1) for dx in (0, 1)], axis=1)   # (25,4,B,12,12)
    m1 = B * 144
    p1 = p1.reshape(25, 4 * m1)
    w1t = params["w1"].reshape(C1, 25).astype(cdt)
    b1 = params["b1"].reshape(C1, 1)
    s1 = conv1_block(p1, w1t, b1, T=T, tau=tau, axon_tau=axon_tau)
    # s1: (T, C1, B*144) bf16 spikes, lane index = b*144 + h*12 + w

    # ---- conv_2 patches built from conv_1 spikes (bf16, exact 0/1) ----------
    # p2[c*25+ki*5+kj, t*4*M2 + q*M2 + b*16 + oh*4 + ow]
    s1_5d = s1.reshape(T, C1, B, 12, 12)
    shift2 = jnp.stack([s1_5d[:, :, :, ki:ki + 8, kj:kj + 8]
                        for ki in range(5) for kj in range(5)], axis=2)
    p2 = jnp.stack([shift2[..., dy::2, dx::2]
                    for dy in (0, 1) for dx in (0, 1)], axis=1)   # (T,4,C1,25,B,4,4)
    m2 = B * 16
    k2 = C1 * 25
    p2 = jnp.transpose(p2, (2, 3, 0, 1, 4, 5, 6)).reshape(k2, T * 4 * m2)
    w2t = params["w2"].reshape(C2, k2).astype(cdt)
    b2 = params["b2"].reshape(C2, 1)

    # ---- fused conv_2 + classifier (FC weight rows already in NCHW order) ---
    wf_mat = params["wf"].T.astype(cdt)                       # (C2*16, 10)
    bfc = params["bf"].reshape(1, -1)
    logits = conv2_classifier_block(p2, w2t, b2, wf_mat, bfc,
                                    T=T, tau=tau, axon_tau=axon_tau, batch=B)

    loss = jnp.mean((logits - labels) ** 2)                   # F.mse_loss (mean)
    return logits, loss


if __name__ == "__main__":
    T, channels, label_size = 4, 4, 10
    tau, axon_tau = 2.0, 4.0

    key = jax.random.PRNGKey(0)
    kp, kx, kl = jax.random.split(key, 3)
    params = init_params(kp, channels)
    x = jax.random.normal(kx, (2, 1, 28, 28), jnp.float32)        # FMNIST-shaped
    labels = jax.nn.one_hot(
        jax.random.randint(kl, (2,), 0, label_size), label_size, dtype=jnp.float32)

    fwd = jax.jit(functools.partial(
        casddtp_csnn_forward, T=T, tau=tau, axon_tau=axon_tau))
    logits, loss = fwd(params, x, labels)
    jax.block_until_ready((logits, loss))

    assert logits.shape == (2, label_size)
    assert loss.shape == ()
    print("KERNEL_OK")
</pallas_src>

<mosaic_0001>
module attributes {stable_mosaic.version = 11 : i64} {
  func.func @_conv1_block_kernel(%arg0: memref<25x1152xbf16, #tpu.memory_space<vmem>>, %arg1: memref<4x25xbf16, #tpu.memory_space<vmem>>, %arg2: memref<4x1xf32, #tpu.memory_space<vmem>>, %arg3: memref<4x4x288xbf16, #tpu.memory_space<vmem>>) attributes {dimension_semantics = [], scalar_prefetch = 0 : i64, scratch_operands = 0 : i64, tpu.core_type = #tpu.core_type<tc>} {
    %c0 = arith.constant 0 : index
    %c0_0 = arith.constant 0 : index
    %0 = vector.load %arg1[%c0, %c0_0] : memref<4x25xbf16, #tpu.memory_space<vmem>>, vector<4x25xbf16>
    %c0_1 = arith.constant 0 : index
    %c0_2 = arith.constant 0 : index
    %1 = vector.load %arg0[%c0_1, %c0_2] : memref<25x1152xbf16, #tpu.memory_space<vmem>>, vector<25x1152xbf16>
    %cst = arith.constant dense<0.000000e+00> : vector<4x1152xf32>
    %2 = tpu.matmul %0, %1, %cst {dimension_numbers = #tpu.dot_dimension_numbers<[1], [0], [0], [1], [0, 0, 1, 1], [], []>} : vector<4x25xbf16>, vector<25x1152xbf16>, vector<4x1152xf32> -> vector<4x1152xf32>
    %3 = vector.extract_strided_slice %2 {offsets = [0, 0], sizes = [4, 288], strides = [1, 1]} : vector<4x1152xf32> to vector<4x288xf32>
    %4 = vector.extract_strided_slice %2 {offsets = [0, 288], sizes = [4, 288], strides = [1, 1]} : vector<4x1152xf32> to vector<4x288xf32>
    %5 = arith.maximumf %3, %4 : vector<4x288xf32>
    %6 = vector.extract_strided_slice %2 {offsets = [0, 576], sizes = [4, 288], strides = [1, 1]} : vector<4x1152xf32> to vector<4x288xf32>
    %7 = arith.maximumf %5, %6 : vector<4x288xf32>
    %8 = vector.extract_strided_slice %2 {offsets = [0, 864], sizes = [4, 288], strides = [1, 1]} : vector<4x1152xf32> to vector<4x288xf32>
    %9 = arith.maximumf %7, %8 : vector<4x288xf32>
    %c0_3 = arith.constant 0 : index
    %c0_4 = arith.constant 0 : index
    %10 = vector.load %arg2[%c0_3, %c0_4] : memref<4x1xf32, #tpu.memory_space<vmem>>, vector<4x1xf32>
    %11 = vector.broadcast %10 : vector<4x1xf32> to vector<4x288xf32>
    %12 = arith.addf %9, %11 : vector<4x288xf32>
    %cst_5 = arith.constant 0.000000e+00 : f32
    %13 = vector.broadcast %cst_5 : f32 to vector<4x288xf32>
    %cst_6 = arith.constant 0.000000e+00 : f32
    %14 = vector.broadcast %cst_6 : f32 to vector<4x288xf32>
    %cst_7 = arith.constant 7.500000e-01 : f32
    %15 = vector.broadcast %cst_7 : f32 to vector<4x288xf32>
    %16 = arith.mulf %13, %15 : vector<4x288xf32>
    %17 = arith.addf %16, %12 : vector<4x288xf32>
    %18 = arith.subf %17, %14 : vector<4x288xf32>
    %cst_8 = arith.constant 5.000000e-01 : f32
    %19 = vector.broadcast %cst_8 : f32 to vector<4x288xf32>
    %20 = arith.mulf %18, %19 : vector<4x288xf32>
    %21 = arith.addf %14, %20 : vector<4x288xf32>
    %cst_9 = arith.constant 1.000000e+00 : f32
    %22 = vector.broadcast %cst_9 : f32 to vector<4x288xf32>
    %23 = arith.cmpf oge, %21, %22 : vector<4x288xf32>
    %24 = arith.extui %23 : vector<4x288xi1> to vector<4x288xi32>
    %25 = arith.sitofp %24 : vector<4x288xi32> to vector<4x288xf32>
    %26 = arith.truncf %25 : vector<4x288xf32> to vector<4x288xbf16>
    %c0_10 = arith.constant 0 : index
    %c0_11 = arith.constant 0 : index
    %c0_12 = arith.constant 0 : index
    %27 = vector.load %arg3[%c0_10, %c0_11, %c0_12] : memref<4x4x288xbf16, #tpu.memory_space<vmem>>, vector<1x4x288xbf16>
    %28 = vector.shape_cast %27 : vector<1x4x288xbf16> to vector<4x288xbf16>
    %29 = vector.shape_cast %26 : vector<4x288xbf16> to vector<1x4x288xbf16>
    tpu.vector_store %arg3[%c0_10, %c0_11, %c0_12], %29 {strides = array<i32>} : memref<4x4x288xbf16, #tpu.memory_space<vmem>>, vector<1x4x288xbf16>,
    %cst_13 = arith.constant 0.000000e+00 : f32
    %30 = vector.broadcast %cst_13 : f32 to vector<4x288xf32>
    %31 = arith.select %23, %30, %21 : vector<4x288xi1>, vector<4x288xf32>
    %cst_14 = arith.constant 7.500000e-01 : f32
    %32 = vector.broadcast %cst_14 : f32 to vector<4x288xf32>
    %33 = arith.mulf %17, %32 : vector<4x288xf32>
    %34 = arith.addf %33, %12 : vector<4x288xf32>
    %35 = arith.subf %34, %31 : vector<4x288xf32>
    %cst_15 = arith.constant 5.000000e-01 : f32
    %36 = vector.broadcast %cst_15 : f32 to vector<4x288xf32>
    %37 = arith.mulf %35, %36 : vector<4x288xf32>
    %38 = arith.addf %31, %37 : vector<4x288xf32>
    %cst_16 = arith.constant 1.000000e+00 : f32
    %39 = vector.broadcast %cst_16 : f32 to vector<4x288xf32>
    %40 = arith.cmpf oge, %38, %39 : vector<4x288xf32>
    %41 = arith.extui %40 : vector<4x288xi1> to vector<4x288xi32>
    %42 = arith.sitofp %41 : vector<4x288xi32> to vector<4x288xf32>
    %43 = arith.truncf %42 : vector<4x288xf32> to vector<4x288xbf16>
    %c1 = arith.constant 1 : index
    %c0_17 = arith.constant 0 : index
    %c0_18 = arith.constant 0 : index
    %44 = vector.load %arg3[%c1, %c0_17, %c0_18] : memref<4x4x288xbf16, #tpu.memory_space<vmem>>, vector<1x4x288xbf16>
    %45 = vector.shape_cast %44 : vector<1x4x288xbf16> to vector<4x288xbf16>
    %46 = vector.shape_cast %43 : vector<4x288xbf16> to vector<1x4x288xbf16>
    tpu.vector_store %arg3[%c1, %c0_17, %c0_18], %46 {strides = array<i32>} : memref<4x4x288xbf16, #tpu.memory_space<vmem>>, vector<1x4x288xbf16>,
    %cst_19 = arith.constant 0.000000e+00 : f32
    %47 = vector.broadcast %cst_19 : f32 to vector<4x288xf32>
    %48 = arith.select %40, %47, %38 : vector<4x288xi1>, vector<4x288xf32>
    %cst_20 = arith.constant 7.500000e-01 : f32
    %49 = vector.broadcast %cst_20 : f32 to vector<4x288xf32>
    %50 = arith.mulf %34, %49 : vector<4x288xf32>
    %51 = arith.addf %50, %12 : vector<4x288xf32>
    %52 = arith.subf %51, %48 : vector<4x288xf32>
    %cst_21 = arith.constant 5.000000e-01 : f32
    %53 = vector.broadcast %cst_21 : f32 to vector<4x288xf32>
    %54 = arith.mulf %52, %53 : vector<4x288xf32>
    %55 = arith.addf %48, %54 : vector<4x288xf32>
    %cst_22 = arith.constant 1.000000e+00 : f32
    %56 = vector.broadcast %cst_22 : f32 to vector<4x288xf32>
    %57 = arith.cmpf oge, %55, %56 : vector<4x288xf32>
    %58 = arith.extui %57 : vector<4x288xi1> to vector<4x288xi32>
    %59 = arith.sitofp %58 : vector<4x288xi32> to vector<4x288xf32>
    %60 = arith.truncf %59 : vector<4x288xf32> to vector<4x288xbf16>
    %c2 = arith.constant 2 : index
    %c0_23 = arith.constant 0 : index
    %c0_24 = arith.constant 0 : index
    %61 = vector.load %arg3[%c2, %c0_23, %c0_24] : memref<4x4x288xbf16, #tpu.memory_space<vmem>>, vector<1x4x288xbf16>
    %62 = vector.shape_cast %61 : vector<1x4x288xbf16> to vector<4x288xbf16>
    %63 = vector.shape_cast %60 : vector<4x288xbf16> to vector<1x4x288xbf16>
    tpu.vector_store %arg3[%c2, %c0_23, %c0_24], %63 {strides = array<i32>} : memref<4x4x288xbf16, #tpu.memory_space<vmem>>, vector<1x4x288xbf16>,
    %cst_25 = arith.constant 0.000000e+00 : f32
    %64 = vector.broadcast %cst_25 : f32 to vector<4x288xf32>
    %65 = arith.select %57, %64, %55 : vector<4x288xi1>, vector<4x288xf32>
    %cst_26 = arith.constant 7.500000e-01 : f32
    %66 = vector.broadcast %cst_26 : f32 to vector<4x288xf32>
    %67 = arith.mulf %51, %66 : vector<4x288xf32>
    %68 = arith.addf %67, %12 : vector<4x288xf32>
    %69 = arith.subf %68, %65 : vector<4x288xf32>
    %cst_27 = arith.constant 5.000000e-01 : f32
    %70 = vector.broadcast %cst_27 : f32 to vector<4x288xf32>
    %71 = arith.mulf %69, %70 : vector<4x288xf32>
    %72 = arith.addf %65, %71 : vector<4x288xf32>
    %cst_28 = arith.constant 1.000000e+00 : f32
    %73 = vector.broadcast %cst_28 : f32 to vector<4x288xf32>
    %74 = arith.cmpf oge, %72, %73 : vector<4x288xf32>
    %75 = arith.extui %74 : vector<4x288xi1> to vector<4x288xi32>
    %76 = arith.sitofp %75 : vector<4x288xi32> to vector<4x288xf32>
    %77 = arith.truncf %76 : vector<4x288xf32> to vector<4x288xbf16>
    %c3 = arith.constant 3 : index
    %c0_29 = arith.constant 0 : index
    %c0_30 = arith.constant 0 : index
    %78 = vector.load %arg3[%c3, %c0_29, %c0_30] : memref<4x4x288xbf16, #tpu.memory_space<vmem>>, vector<1x4x288xbf16>
    %79 = vector.shape_cast %78 : vector<1x4x288xbf16> to vector<4x288xbf16>
    %80 = vector.shape_cast %77 : vector<4x288xbf16> to vector<1x4x288xbf16>
    tpu.vector_store %arg3[%c3, %c0_29, %c0_30], %80 {strides = array<i32>} : memref<4x4x288xbf16, #tpu.memory_space<vmem>>, vector<1x4x288xbf16>,
    return
  }
}

module attributes {stable_mosaic.version = 11 : i64} {
  func.func @_conv2_classifier_kernel(%arg0: memref<100x512xbf16, #tpu.memory_space<vmem>>, %arg1: memref<8x100xbf16, #tpu.memory_space<vmem>>, %arg2: memref<8x1xf32, #tpu.memory_space<vmem>>, %arg3: memref<128x10xbf16, #tpu.memory_space<vmem>>, %arg4: memref<1x10xf32, #tpu.memory_space<vmem>>, %arg5: memref<2x10xf32, #tpu.memory_space<vmem>>, %arg6: memref<8x128xf32, #tpu.memory_space<vmem>>) attributes {dimension_semantics = [], scalar_prefetch = 0 : i64, scratch_operands = 1 : i64, tpu.core_type = #tpu.core_type<tc>} {
    %c0 = arith.constant 0 : index
    %c0_0 = arith.constant 0 : index
    %0 = vector.load %arg1[%c0, %c0_0] : memref<8x100xbf16, #tpu.memory_space<vmem>>, vector<8x100xbf16>
    %c0_1 = arith.constant 0 : index
    %c0_2 = arith.constant 0 : index
    %1 = vector.load %arg0[%c0_1, %c0_2] : memref<100x512xbf16, #tpu.memory_space<vmem>>, vector<100x512xbf16>
    %cst = arith.constant dense<0.000000e+00> : vector<8x512xf32>
    %2 = tpu.matmul %0, %1, %cst {dimension_numbers = #tpu.dot_dimension_numbers<[1], [0], [0], [1], [0, 0, 1, 1], [], []>} : vector<8x100xbf16>, vector<100x512xbf16>, vector<8x512xf32> -> vector<8x512xf32>
    %cst_3 = arith.constant 0.000000e+00 : f32
    %3 = vector.broadcast %cst_3 : f32 to vector<8x32xf32>
    %cst_4 = arith.constant 0.000000e+00 : f32
    %4 = vector.broadcast %cst_4 : f32 to vector<8x32xf32>
    %5 = vector.extract_strided_slice %2 {offsets = [0, 0], sizes = [8, 128], strides = [1, 1]} : vector<8x512xf32> to vector<8x128xf32>
    %6 = vector.extract_strided_slice %5 {offsets = [0, 0], sizes = [8, 32], strides = [1, 1]} : vector<8x128xf32> to vector<8x32xf32>
    %7 = vector.extract_strided_slice %5 {offsets = [0, 32], sizes = [8, 32], strides = [1, 1]} : vector<8x128xf32> to vector<8x32xf32>
    %8 = arith.maximumf %6, %7 : vector<8x32xf32>
    %9 = vector.extract_strided_slice %5 {offsets = [0, 64], sizes = [8, 32], strides = [1, 1]} : vector<8x128xf32> to vector<8x32xf32>
    %10 = arith.maximumf %8, %9 : vector<8x32xf32>
    %11 = vector.extract_strided_slice %5 {offsets = [0, 96], sizes = [8, 32], strides = [1, 1]} : vector<8x128xf32> to vector<8x32xf32>
    %12 = arith.maximumf %10, %11 : vector<8x32xf32>
    %c0_5 = arith.constant 0 : index
    %c0_6 = arith.constant 0 : index
    %13 = vector.load %arg2[%c0_5, %c0_6] : memref<8x1xf32, #tpu.memory_space<vmem>>, vector<8x1xf32>
    %14 = vector.broadcast %13 : vector<8x1xf32> to vector<8x32xf32>
    %15 = arith.addf %12, %14 : vector<8x32xf32>
    %cst_7 = arith.constant 7.500000e-01 : f32
    %16 = vector.broadcast %cst_7 : f32 to vector<8x32xf32>
    %17 = arith.mulf %3, %16 : vector<8x32xf32>
    %18 = arith.addf %17, %15 : vector<8x32xf32>
    %19 = arith.subf %18, %4 : vector<8x32xf32>
    %cst_8 = arith.constant 5.000000e-01 : f32
    %20 = vector.broadcast %cst_8 : f32 to vector<8x32xf32>
    %21 = arith.mulf %19, %20 : vector<8x32xf32>
    %22 = arith.addf %4, %21 : vector<8x32xf32>
    %cst_9 = arith.constant 1.000000e+00 : f32
    %23 = vector.broadcast %cst_9 : f32 to vector<8x32xf32>
    %24 = arith.cmpf oge, %22, %23 : vector<8x32xf32>
    %25 = arith.extui %24 : vector<8x32xi1> to vector<8x32xi32>
    %26 = arith.sitofp %25 : vector<8x32xi32> to vector<8x32xf32>
    %cst_10 = arith.constant 0.000000e+00 : f32
    %27 = vector.broadcast %cst_10 : f32 to vector<8x32xf32>
    %28 = arith.select %24, %27, %22 : vector<8x32xi1>, vector<8x32xf32>
    %29 = vector.extract_strided_slice %26 {offsets = [0, 0], sizes = [1, 32], strides = [1, 1]} : vector<8x32xf32> to vector<1x32xf32>
    %30 = vector.extract_strided_slice %29 {offsets = [0, 0], sizes = [1, 16], strides = [1, 1]} : vector<1x32xf32> to vector<1x16xf32>
    %c0_11 = arith.constant 0 : index
    %c0_12 = arith.constant 0 : index
    %31 = vector.load %arg6[%c0_11, %c0_12] : memref<8x128xf32, #tpu.memory_space<vmem>>, vector<1x16xf32>
    tpu.vector_store %arg6[%c0_11, %c0_12], %30 {strides = array<i32>} : memref<8x128xf32, #tpu.memory_space<vmem>>, vector<1x16xf32>,
    %32 = vector.extract_strided_slice %29 {offsets = [0, 16], sizes = [1, 16], strides = [1, 1]} : vector<1x32xf32> to vector<1x16xf32>
    %c1 = arith.constant 1 : index
    %c0_13 = arith.constant 0 : index
    %33 = vector.load %arg6[%c1, %c0_13] : memref<8x128xf32, #tpu.memory_space<vmem>>, vector<1x16xf32>
    tpu.vector_store %arg6[%c1, %c0_13], %32 {strides = array<i32>} : memref<8x128xf32, #tpu.memory_space<vmem>>, vector<1x16xf32>,
    %34 = vector.extract_strided_slice %26 {offsets = [1, 0], sizes = [1, 32], strides = [1, 1]} : vector<8x32xf32> to vector<1x32xf32>
    %35 = vector.extract_strided_slice %34 {offsets = [0, 0], sizes = [1, 16], strides = [1, 1]} : vector<1x32xf32> to vector<1x16xf32>
    %c0_14 = arith.constant 0 : index
    %c16 = arith.constant 16 : index
    %36 = vector.load %arg6[%c0_14, %c16] : memref<8x128xf32, #tpu.memory_space<vmem>>, vector<1x16xf32>
    tpu.vector_store %arg6[%c0_14, %c16], %35 {strides = array<i32>} : memref<8x128xf32, #tpu.memory_space<vmem>>, vector<1x16xf32>,
    %37 = vector.extract_strided_slice %34 {offsets = [0, 16], sizes = [1, 16], strides = [1, 1]} : vector<1x32xf32> to vector<1x16xf32>
    %c1_15 = arith.constant 1 : index
    %c16_16 = arith.constant 16 : index
    %38 = vector.load %arg6[%c1_15, %c16_16] : memref<8x128xf32, #tpu.memory_space<vmem>>, vector<1x16xf32>
    tpu.vector_store %arg6[%c1_15, %c16_16], %37 {strides = array<i32>} : memref<8x128xf32, #tpu.memory_space<vmem>>, vector<1x16xf32>,
    %39 = vector.extract_strided_slice %26 {offsets = [2, 0], sizes = [1, 32], strides = [1, 1]} : vector<8x32xf32> to vector<1x32xf32>
    %40 = vector.extract_strided_slice %39 {offsets = [0, 0], sizes = [1, 16], strides = [1, 1]} : vector<1x32xf32> to vector<1x16xf32>
    %c0_17 = arith.constant 0 : index
    %c32 = arith.constant 32 : index
    %41 = vector.load %arg6[%c0_17, %c32] : memref<8x128xf32, #tpu.memory_space<vmem>>, vector<1x16xf32>
    tpu.vector_store %arg6[%c0_17, %c32], %40 {strides = array<i32>} : memref<8x128xf32, #tpu.memory_space<vmem>>, vector<1x16xf32>,
    %42 = vector.extract_strided_slice %39 {offsets = [0, 16], sizes = [1, 16], strides = [1, 1]} : vector<1x32xf32> to vector<1x16xf32>
    %c1_18 = arith.constant 1 : index
    %c32_19 = arith.constant 32 : index
    %43 = vector.load %arg6[%c1_18, %c32_19] : memref<8x128xf32, #tpu.memory_space<vmem>>, vector<1x16xf32>
    tpu.vector_store %arg6[%c1_18, %c32_19], %42 {strides = array<i32>} : memref<8x128xf32, #tpu.memory_space<vmem>>, vector<1x16xf32>,
    %44 = vector.extract_strided_slice %26 {offsets = [3, 0], sizes = [1, 32], strides = [1, 1]} : vector<8x32xf32> to vector<1x32xf32>
    %45 = vector.extract_strided_slice %44 {offsets = [0, 0], sizes = [1, 16], strides = [1, 1]} : vector<1x32xf32> to vector<1x16xf32>
    %c0_20 = arith.constant 0 : index
    %c48 = arith.constant 48 : index
    %46 = vector.load %arg6[%c0_20, %c48] : memref<8x128xf32, #tpu.memory_space<vmem>>, vector<1x16xf32>
    tpu.vector_store %arg6[%c0_20, %c48], %45 {strides = array<i32>} : memref<8x128xf32, #tpu.memory_space<vmem>>, vector<1x16xf32>,
    %47 = vector.extract_strided_slice %44 {offsets = [0, 16], sizes = [1, 16], strides = [1, 1]} : vector<1x32xf32> to vector<1x16xf32>
    %c1_21 = arith.constant 1 : index
    %c48_22 = arith.constant 48 : index
    %48 = vector.load %arg6[%c1_21, %c48_22] : memref<8x128xf32, #tpu.memory_space<vmem>>, vector<1x16xf32>
    tpu.vector_store %arg6[%c1_21, %c48_22], %47 {strides = array<i32>} : memref<8x128xf32, #tpu.memory_space<vmem>>, vector<1x16xf32>,
    %49 = vector.extract_strided_slice %26 {offsets = [4, 0], sizes = [1, 32], strides = [1, 1]} : vector<8x32xf32> to vector<1x32xf32>
    %50 = vector.extract_strided_slice %49 {offsets = [0, 0], sizes = [1, 16], strides = [1, 1]} : vector<1x32xf32> to vector<1x16xf32>
    %c0_23 = arith.constant 0 : index
    %c64 = arith.constant 64 : index
    %51 = vector.load %arg6[%c0_23, %c64] : memref<8x128xf32, #tpu.memory_space<vmem>>, vector<1x16xf32>
    tpu.vector_store %arg6[%c0_23, %c64], %50 {strides = array<i32>} : memref<8x128xf32, #tpu.memory_space<vmem>>, vector<1x16xf32>,
    %52 = vector.extract_strided_slice %49 {offsets = [0, 16], sizes = [1, 16], strides = [1, 1]} : vector<1x32xf32> to vector<1x16xf32>
    %c1_24 = arith.constant 1 : index
    %c64_25 = arith.constant 64 : index
    %53 = vector.load %arg6[%c1_24, %c64_25] : memref<8x128xf32, #tpu.memory_space<vmem>>, vector<1x16xf32>
    tpu.vector_store %arg6[%c1_24, %c64_25], %52 {strides = array<i32>} : memref<8x128xf32, #tpu.memory_space<vmem>>, vector<1x16xf32>,
    %54 = vector.extract_strided_slice %26 {offsets = [5, 0], sizes = [1, 32], strides = [1, 1]} : vector<8x32xf32> to vector<1x32xf32>
    %55 = vector.extract_strided_slice %54 {offsets = [0, 0], sizes = [1, 16], strides = [1, 1]} : vector<1x32xf32> to vector<1x16xf32>
    %c0_26 = arith.constant 0 : index
    %c80 = arith.constant 80 : index
    %56 = vector.load %arg6[%c0_26, %c80] : memref<8x128xf32, #tpu.memory_space<vmem>>, vector<1x16xf32>
    tpu.vector_store %arg6[%c0_26, %c80], %55 {strides = array<i32>} : memref<8x128xf32, #tpu.memory_space<vmem>>, vector<1x16xf32>,
    %57 = vector.extract_strided_slice %54 {offsets = [0, 16], sizes = [1, 16], strides = [1, 1]} : vector<1x32xf32> to vector<1x16xf32>
    %c1_27 = arith.constant 1 : index
    %c80_28 = arith.constant 80 : index
    %58 = vector.load %arg6[%c1_27, %c80_28] : memref<8x128xf32, #tpu.memory_space<vmem>>, vector<1x16xf32>
    tpu.vector_store %arg6[%c1_27, %c80_28], %57 {strides = array<i32>} : memref<8x128xf32, #tpu.memory_space<vmem>>, vector<1x16xf32>,
    %59 = vector.extract_strided_slice %26 {offsets = [6, 0], sizes = [1, 32], strides = [1, 1]} : vector<8x32xf32> to vector<1x32xf32>
    %60 = vector.extract_strided_slice %59 {offsets = [0, 0], sizes = [1, 16], strides = [1, 1]} : vector<1x32xf32> to vector<1x16xf32>
    %c0_29 = arith.constant 0 : index
    %c96 = arith.constant 96 : index
    %61 = vector.load %arg6[%c0_29, %c96] : memref<8x128xf32, #tpu.memory_space<vmem>>, vector<1x16xf32>
    tpu.vector_store %arg6[%c0_29, %c96], %60 {strides = array<i32>} : memref<8x128xf32, #tpu.memory_space<vmem>>, vector<1x16xf32>,
    %62 = vector.extract_strided_slice %59 {offsets = [0, 16], sizes = [1, 16], strides = [1, 1]} : vector<1x32xf32> to vector<1x16xf32>
    %c1_30 = arith.constant 1 : index
    %c96_31 = arith.constant 96 : index
    %63 = vector.load %arg6[%c1_30, %c96_31] : memref<8x128xf32, #tpu.memory_space<vmem>>, vector<1x16xf32>
    tpu.vector_store %arg6[%c1_30, %c96_31], %62 {strides = array<i32>} : memref<8x128xf32, #tpu.memory_space<vmem>>, vector<1x16xf32>,
    %64 = vector.extract_strided_slice %26 {offsets = [7, 0], sizes = [1, 32], strides = [1, 1]} : vector<8x32xf32> to vector<1x32xf32>
    %65 = vector.extract_strided_slice %64 {offsets = [0, 0], sizes = [1, 16], strides = [1, 1]} : vector<1x32xf32> to vector<1x16xf32>
    %c0_32 = arith.constant 0 : index
    %c112 = arith.constant 112 : index
    %66 = vector.load %arg6[%c0_32, %c112] : memref<8x128xf32, #tpu.memory_space<vmem>>, vector<1x16xf32>
    tpu.vector_store %arg6[%c0_32, %c112], %65 {strides = array<i32>} : memref<8x128xf32, #tpu.memory_space<vmem>>, vector<1x16xf32>,
    %67 = vector.extract_strided_slice %64 {offsets = [0, 16], sizes = [1, 16], strides = [1, 1]} : vector<1x32xf32> to vector<1x16xf32>
    %c1_33 = arith.constant 1 : index
    %c112_34 = arith.constant 112 : index
    %68 = vector.load %arg6[%c1_33, %c112_34] : memref<8x128xf32, #tpu.memory_space<vmem>>, vector<1x16xf32>
    tpu.vector_store %arg6[%c1_33, %c112_34], %67 {strides = array<i32>} : memref<8x128xf32, #tpu.memory_space<vmem>>, vector<1x16xf32>,
    %69 = vector.extract_strided_slice %2 {offsets = [0, 128], sizes = [8, 128], strides = [1, 1]} : vector<8x512xf32> to vector<8x128xf32>
    %70 = vector.extract_strided_slice %69 {offsets = [0, 0], sizes = [8, 32], strides = [1, 1]} : vector<8x128xf32> to vector<8x32xf32>
    %71 = vector.extract_strided_slice %69 {offsets = [0, 32], sizes = [8, 32], strides = [1, 1]} : vector<8x128xf32> to vector<8x32xf32>
    %72 = arith.maximumf %70, %71 : vector<8x32xf32>
    %73 = vector.extract_strided_slice %69 {offsets = [0, 64], sizes = [8, 32], strides = [1, 1]} : vector<8x128xf32> to vector<8x32xf32>
    %74 = arith.maximumf %72, %73 : vector<8x32xf32>
    %75 = vector.extract_strided_slice %69 {offsets = [0, 96], sizes = [8, 32], strides = [1, 1]} : vector<8x128xf32> to vector<8x32xf32>
    %76 = arith.maximumf %74, %75 : vector<8x32xf32>
    %c0_35 = arith.constant 0 : index
    %c0_36 = arith.constant 0 : index
    %77 = vector.load %arg2[%c0_35, %c0_36] : memref<8x1xf32, #tpu.memory_space<vmem>>, vector<8x1xf32>
    %78 = vector.broadcast %77 : vector<8x1xf32> to vector<8x32xf32>
    %79 = arith.addf %76, %78 : vector<8x32xf32>
    %cst_37 = arith.constant 7.500000e-01 : f32
    %80 = vector.broadcast %cst_37 : f32 to vector<8x32xf32>
    %81 = arith.mulf %18, %80 : vector<8x32xf32>
    %82 = arith.addf %81, %79 : vector<8x32xf32>
    %83 = arith.subf %82, %28 : vector<8x32xf32>
    %cst_38 = arith.constant 5.000000e-01 : f32
    %84 = vector.broadcast %cst_38 : f32 to vector<8x32xf32>
    %85 = arith.mulf %83, %84 : vector<8x32xf32>
    %86 = arith.addf %28, %85 : vector<8x32xf32>
    %cst_39 = arith.constant 1.000000e+00 : f32
    %87 = vector.broadcast %cst_39 : f32 to vector<8x32xf32>
    %88 = arith.cmpf oge, %86, %87 : vector<8x32xf32>
    %89 = arith.extui %88 : vector<8x32xi1> to vector<8x32xi32>
    %90 = arith.sitofp %89 : vector<8x32xi32> to vector<8x32xf32>
    %cst_40 = arith.constant 0.000000e+00 : f32
    %91 = vector.broadcast %cst_40 : f32 to vector<8x32xf32>
    %92 = arith.select %88, %91, %86 : vector<8x32xi1>, vector<8x32xf32>
    %93 = vector.extract_strided_slice %90 {offsets = [0, 0], sizes = [1, 32], strides = [1, 1]} : vector<8x32xf32> to vector<1x32xf32>
    %94 = vector.extract_strided_slice %93 {offsets = [0, 0], sizes = [1, 16], strides = [1, 1]} : vector<1x32xf32> to vector<1x16xf32>
    %c2 = arith.constant 2 : index
    %c0_41 = arith.constant 0 : index
    %95 = vector.load %arg6[%c2, %c0_41] : memref<8x128xf32, #tpu.memory_space<vmem>>, vector<1x16xf32>
    tpu.vector_store %arg6[%c2, %c0_41], %94 {strides = array<i32>} : memref<8x128xf32, #tpu.memory_space<vmem>>, vector<1x16xf32>,
    %96 = vector.extract_strided_slice %93 {offsets = [0, 16], sizes = [1, 16], strides = [1, 1]} : vector<1x32xf32> to vector<1x16xf32>
    %c3 = arith.constant 3 : index
    %c0_42 = arith.constant 0 : index
    %97 = vector.load %arg6[%c3, %c0_42] : memref<8x128xf32, #tpu.memory_space<vmem>>, vector<1x16xf32>
    tpu.vector_store %arg6[%c3, %c0_42], %96 {strides = array<i32>} : memref<8x128xf32, #tpu.memory_space<vmem>>, vector<1x16xf32>,
    %98 = vector.extract_strided_slice %90 {offsets = [1, 0], sizes = [1, 32], strides = [1, 1]} : vector<8x32xf32> to vector<1x32xf32>
    %99 = vector.extract_strided_slice %98 {offsets = [0, 0], sizes = [1, 16], strides = [1, 1]} : vector<1x32xf32> to vector<1x16xf32>
    %c2_43 = arith.constant 2 : index
    %c16_44 = arith.constant 16 : index
    %100 = vector.load %arg6[%c2_43, %c16_44] : memref<8x128xf32, #tpu.memory_space<vmem>>, vector<1x16xf32>
    tpu.vector_store %arg6[%c2_43, %c16_44], %99 {strides = array<i32>} : memref<8x128xf32, #tpu.memory_space<vmem>>, vector<1x16xf32>,
    %101 = vector.extract_strided_slice %98 {offsets = [0, 16], sizes = [1, 16], strides = [1, 1]} : vector<1x32xf32> to vector<1x16xf32>
    %c3_45 = arith.constant 3 : index
    %c16_46 = arith.constant 16 : index
    %102 = vector.load %arg6[%c3_45, %c16_46] : memref<8x128xf32, #tpu.memory_space<vmem>>, vector<1x16xf32>
    tpu.vector_store %arg6[%c3_45, %c16_46], %101 {strides = array<i32>} : memref<8x128xf32, #tpu.memory_space<vmem>>, vector<1x16xf32>,
    %103 = vector.extract_strided_slice %90 {offsets = [2, 0], sizes = [1, 32], strides = [1, 1]} : vector<8x32xf32> to vector<1x32xf32>
    %104 = vector.extract_strided_slice %103 {offsets = [0, 0], sizes = [1, 16], strides = [1, 1]} : vector<1x32xf32> to vector<1x16xf32>
    %c2_47 = arith.constant 2 : index
    %c32_48 = arith.constant 32 : index
    %105 = vector.load %arg6[%c2_47, %c32_48] : memref<8x128xf32, #tpu.memory_space<vmem>>, vector<1x16xf32>
    tpu.vector_store %arg6[%c2_47, %c32_48], %104 {strides = array<i32>} : memref<8x128xf32, #tpu.memory_space<vmem>>, vector<1x16xf32>,
    %106 = vector.extract_strided_slice %103 {offsets = [0, 16], sizes = [1, 16], strides = [1, 1]} : vector<1x32xf32> to vector<1x16xf32>
    %c3_49 = arith.constant 3 : index
    %c32_50 = arith.constant 32 : index
    %107 = vector.load %arg6[%c3_49, %c32_50] : memref<8x128xf32, #tpu.memory_space<vmem>>, vector<1x16xf32>
    tpu.vector_store %arg6[%c3_49, %c32_50], %106 {strides = array<i32>} : memref<8x128xf32, #tpu.memory_space<vmem>>, vector<1x16xf32>,
    %108 = vector.extract_strided_slice %90 {offsets = [3, 0], sizes = [1, 32], strides = [1, 1]} : vector<8x32xf32> to vector<1x32xf32>
    %109 = vector.extract_strided_slice %108 {offsets = [0, 0], sizes = [1, 16], strides = [1, 1]} : vector<1x32xf32> to vector<1x16xf32>
    %c2_51 = arith.constant 2 : index
    %c48_52 = arith.constant 48 : index
    %110 = vector.load %arg6[%c2_51, %c48_52] : memref<8x128xf32, #tpu.memory_space<vmem>>, vector<1x16xf32>
    tpu.vector_store %arg6[%c2_51, %c48_52], %109 {strides = array<i32>} : memref<8x128xf32, #tpu.memory_space<vmem>>, vector<1x16xf32>,
    %111 = vector.extract_strided_slice %108 {offsets = [0, 16], sizes = [1, 16], strides = [1, 1]} : vector<1x32xf32> to vector<1x16xf32>
    %c3_53 = arith.constant 3 : index
    %c48_54 = arith.constant 48 : index
    %112 = vector.load %arg6[%c3_53, %c48_54] : memref<8x128xf32, #tpu.memory_space<vmem>>, vector<1x16xf32>
    tpu.vector_store %arg6[%c3_53, %c48_54], %111 {strides = array<i32>} : memref<8x128xf32, #tpu.memory_space<vmem>>, vector<1x16xf32>,
    %113 = vector.extract_strided_slice %90 {offsets = [4, 0], sizes = [1, 32], strides = [1, 1]} : vector<8x32xf32> to vector<1x32xf32>
    %114 = vector.extract_strided_slice %113 {offsets = [0, 0], sizes = [1, 16], strides = [1, 1]} : vector<1x32xf32> to vector<1x16xf32>
    %c2_55 = arith.constant 2 : index
    %c64_56 = arith.constant 64 : index
    %115 = vector.load %arg6[%c2_55, %c64_56] : memref<8x128xf32, #tpu.memory_space<vmem>>, vector<1x16xf32>
    tpu.vector_store %arg6[%c2_55, %c64_56], %114 {strides = array<i32>} : memref<8x128xf32, #tpu.memory_space<vmem>>, vector<1x16xf32>,
    %116 = vector.extract_strided_slice %113 {offsets = [0, 16], sizes = [1, 16], strides = [1, 1]} : vector<1x32xf32> to vector<1x16xf32>
    %c3_57 = arith.constant 3 : index
    %c64_58 = arith.constant 64 : index
    %117 = vector.load %arg6[%c3_57, %c64_58] : memref<8x128xf32, #tpu.memory_space<vmem>>, vector<1x16xf32>
    tpu.vector_store %arg6[%c3_57, %c64_58], %116 {strides = array<i32>} : memref<8x128xf32, #tpu.memory_space<vmem>>, vector<1x16xf32>,
    %118 = vector.extract_strided_slice %90 {offsets = [5, 0], sizes = [1, 32], strides = [1, 1]} : vector<8x32xf32> to vector<1x32xf32>
    %119 = vector.extract_strided_slice %118 {offsets = [0, 0], sizes = [1, 16], strides = [1, 1]} : vector<1x32xf32> to vector<1x16xf32>
    %c2_59 = arith.constant 2 : index
    %c80_60 = arith.constant 80 : index
    %120 = vector.load %arg6[%c2_59, %c80_60] : memref<8x128xf32, #tpu.memory_space<vmem>>, vector<1x16xf32>
    tpu.vector_store %arg6[%c2_59, %c80_60], %119 {strides = array<i32>} : memref<8x128xf32, #tpu.memory_space<vmem>>, vector<1x16xf32>,
    %121 = vector.extract_strided_slice %118 {offsets = [0, 16], sizes = [1, 16], strides = [1, 1]} : vector<1x32xf32> to vector<1x16xf32>
    %c3_61 = arith.constant 3 : index
    %c80_62 = arith.constant 80 : index
    %122 = vector.load %arg6[%c3_61, %c80_62] : memref<8x128xf32, #tpu.memory_space<vmem>>, vector<1x16xf32>
    tpu.vector_store %arg6[%c3_61, %c80_62], %121 {strides = array<i32>} : memref<8x128xf32, #tpu.memory_space<vmem>>, vector<1x16xf32>,
    %123 = vector.extract_strided_slice %90 {offsets = [6, 0], sizes = [1, 32], strides = [1, 1]} : vector<8x32xf32> to vector<1x32xf32>
    %124 = vector.extract_strided_slice %123 {offsets = [0, 0], sizes = [1, 16], strides = [1, 1]} : vector<1x32xf32> to vector<1x16xf32>
    %c2_63 = arith.constant 2 : index
    %c96_64 = arith.constant 96 : index
    %125 = vector.load %arg6[%c2_63, %c96_64] : memref<8x128xf32, #tpu.memory_space<vmem>>, vector<1x16xf32>
    tpu.vector_store %arg6[%c2_63, %c96_64], %124 {strides = array<i32>} : memref<8x128xf32, #tpu.memory_space<vmem>>, vector<1x16xf32>,
    %126 = vector.extract_strided_slice %123 {offsets = [0, 16], sizes = [1, 16], strides = [1, 1]} : vector<1x32xf32> to vector<1x16xf32>
    %c3_65 = arith.constant 3 : index
    %c96_66 = arith.constant 96 : index
    %127 = vector.load %arg6[%c3_65, %c96_66] : memref<8x128xf32, #tpu.memory_space<vmem>>, vector<1x16xf32>
    tpu.vector_store %arg6[%c3_65, %c96_66], %126 {strides = array<i32>} : memref<8x128xf32, #tpu.memory_space<vmem>>, vector<1x16xf32>,
    %128 = vector.extract_strided_slice %90 {offsets = [7, 0], sizes = [1, 32], strides = [1, 1]} : vector<8x32xf32> to vector<1x32xf32>
    %129 = vector.extract_strided_slice %128 {offsets = [0, 0], sizes = [1, 16], strides = [1, 1]} : vector<1x32xf32> to vector<1x16xf32>
    %c2_67 = arith.constant 2 : index
    %c112_68 = arith.constant 112 : index
    %130 = vector.load %arg6[%c2_67, %c112_68] : memref<8x128xf32, #tpu.memory_space<vmem>>, vector<1x16xf32>
    tpu.vector_store %arg6[%c2_67, %c112_68], %129 {strides = array<i32>} : memref<8x128xf32, #tpu.memory_space<vmem>>, vector<1x16xf32>,
    %131 = vector.extract_strided_slice %128 {offsets = [0, 16], sizes = [1, 16], strides = [1, 1]} : vector<1x32xf32> to vector<1x16xf32>
    %c3_69 = arith.constant 3 : index
    %c112_70 = arith.constant 112 : index
    %132 = vector.load %arg6[%c3_69, %c112_70] : memref<8x128xf32, #tpu.memory_space<vmem>>, vector<1x16xf32>
    tpu.vector_store %arg6[%c3_69, %c112_70], %131 {strides = array<i32>} : memref<8x128xf32, #tpu.memory_space<vmem>>, vector<1x16xf32>,
    %133 = vector.extract_strided_slice %2 {offsets = [0, 256], sizes = [8, 128], strides = [1, 1]} : vector<8x512xf32> to vector<8x128xf32>
    %134 = vector.extract_strided_slice %133 {offsets = [0, 0], sizes = [8, 32], strides = [1, 1]} : vector<8x128xf32> to vector<8x32xf32>
    %135 = vector.extract_strided_slice %133 {offsets = [0, 32], sizes = [8, 32], strides = [1, 1]} : vector<8x128xf32> to vector<8x32xf32>
    %136 = arith.maximumf %134, %135 : vector<8x32xf32>
    %137 = vector.extract_strided_slice %133 {offsets = [0, 64], sizes = [8, 32], strides = [1, 1]} : vector<8x128xf32> to vector<8x32xf32>
    %138 = arith.maximumf %136, %137 : vector<8x32xf32>
    %139 = vector.extract_strided_slice %133 {offsets = [0, 96], sizes = [8, 32], strides = [1, 1]} : vector<8x128xf32> to vector<8x32xf32>
    %140 = arith.maximumf %138, %139 : vector<8x32xf32>
    %c0_71 = arith.constant 0 : index
    %c0_72 = arith.constant 0 : index
    %141 = vector.load %arg2[%c0_71, %c0_72] : memref<8x1xf32, #tpu.memory_space<vmem>>, vector<8x1xf32>
    %142 = vector.broadcast %141 : vector<8x1xf32> to vector<8x32xf32>
    %143 = arith.addf %140, %142 : vector<8x32xf32>
    %cst_73 = arith.constant 7.500000e-01 : f32
    %144 = vector.broadcast %cst_73 : f32 to vector<8x32xf32>
    %145 = arith.mulf %82, %144 : vector<8x32xf32>
    %146 = arith.addf %145, %143 : vector<8x32xf32>
    %147 = arith.subf %146, %92 : vector<8x32xf32>
    %cst_74 = arith.constant 5.000000e-01 : f32
    %148 = vector.broadcast %cst_74 : f32 to vector<8x32xf32>
    %149 = arith.mulf %147, %148 : vector<8x32xf32>
    %150 = arith.addf %92, %149 : vector<8x32xf32>
    %cst_75 = arith.constant 1.000000e+00 : f32
    %151 = vector.broadcast %cst_75 : f32 to vector<8x32xf32>
    %152 = arith.cmpf oge, %150, %151 : vector<8x32xf32>
    %153 = arith.extui %152 : vector<8x32xi1> to vector<8x32xi32>
    %154 = arith.sitofp %153 : vector<8x32xi32> to vector<8x32xf32>
    %cst_76 = arith.constant 0.000000e+00 : f32
    %155 = vector.broadcast %cst_76 : f32 to vector<8x32xf32>
    %156 = arith.select %152, %155, %150 : vector<8x32xi1>, vector<8x32xf32>
    %157 = vector.extract_strided_slice %154 {offsets = [0, 0], sizes = [1, 32], strides = [1, 1]} : vector<8x32xf32> to vector<1x32xf32>
    %158 = vector.extract_strided_slice %157 {offsets = [0, 0], sizes = [1, 16], strides = [1, 1]} : vector<1x32xf32> to vector<1x16xf32>
    %c4 = arith.constant 4 : index
    %c0_77 = arith.constant 0 : index
    %159 = vector.load %arg6[%c4, %c0_77] : memref<8x128xf32, #tpu.memory_space<vmem>>, vector<1x16xf32>
    tpu.vector_store %arg6[%c4, %c0_77], %158 {strides = array<i32>} : memref<8x128xf32, #tpu.memory_space<vmem>>, vector<1x16xf32>,
    %160 = vector.extract_strided_slice %157 {offsets = [0, 16], sizes = [1, 16], strides = [1, 1]} : vector<1x32xf32> to vector<1x16xf32>
    %c5 = arith.constant 5 : index
    %c0_78 = arith.constant 0 : index
    %161 = vector.load %arg6[%c5, %c0_78] : memref<8x128xf32, #tpu.memory_space<vmem>>, vector<1x16xf32>
    tpu.vector_store %arg6[%c5, %c0_78], %160 {strides = array<i32>} : memref<8x128xf32, #tpu.memory_space<vmem>>, vector<1x16xf32>,
    %162 = vector.extract_strided_slice %154 {offsets = [1, 0], sizes = [1, 32], strides = [1, 1]} : vector<8x32xf32> to vector<1x32xf32>
    %163 = vector.extract_strided_slice %162 {offsets = [0, 0], sizes = [1, 16], strides = [1, 1]} : vector<1x32xf32> to vector<1x16xf32>
    %c4_79 = arith.constant 4 : index
    %c16_80 = arith.constant 16 : index
    %164 = vector.load %arg6[%c4_79, %c16_80] : memref<8x128xf32, #tpu.memory_space<vmem>>, vector<1x16xf32>
    tpu.vector_store %arg6[%c4_79, %c16_80], %163 {strides = array<i32>} : memref<8x128xf32, #tpu.memory_space<vmem>>, vector<1x16xf32>,
    %165 = vector.extract_strided_slice %162 {offsets = [0, 16], sizes = [1, 16], strides = [1, 1]} : vector<1x32xf32> to vector<1x16xf32>
    %c5_81 = arith.constant 5 : index
    %c16_82 = arith.constant 16 : index
    %166 = vector.load %arg6[%c5_81, %c16_82] : memref<8x128xf32, #tpu.memory_space<vmem>>, vector<1x16xf32>
    tpu.vector_store %arg6[%c5_81, %c16_82], %165 {strides = array<i32>} : memref<8x128xf32, #tpu.memory_space<vmem>>, vector<1x16xf32>,
    %167 = vector.extract_strided_slice %154 {offsets = [2, 0], sizes = [1, 32], strides = [1, 1]} : vector<8x32xf32> to vector<1x32xf32>
    %168 = vector.extract_strided_slice %167 {offsets = [0, 0], sizes = [1, 16], strides = [1, 1]} : vector<1x32xf32> to vector<1x16xf32>
    %c4_83 = arith.constant 4 : index
    %c32_84 = arith.constant 32 : index
    %169 = vector.load %arg6[%c4_83, %c32_84] : memref<8x128xf32, #tpu.memory_space<vmem>>, vector<1x16xf32>
    tpu.vector_store %arg6[%c4_83, %c32_84], %168 {strides = array<i32>} : memref<8x128xf32, #tpu.memory_space<vmem>>, vector<1x16xf32>,
    %170 = vector.extract_strided_slice %167 {offsets = [0, 16], sizes = [1, 16], strides = [1, 1]} : vector<1x32xf32> to vector<1x16xf32>
    %c5_85 = arith.constant 5 : index
    %c32_86 = arith.constant 32 : index
    %171 = vector.load %arg6[%c5_85, %c32_86] : memref<8x128xf32, #tpu.memory_space<vmem>>, vector<1x16xf32>
    tpu.vector_store %arg6[%c5_85, %c32_86], %170 {strides = array<i32>} : memref<8x128xf32, #tpu.memory_space<vmem>>, vector<1x16xf32>,
    %172 = vector.extract_strided_slice %154 {offsets = [3, 0], sizes = [1, 32], strides = [1, 1]} : vector<8x32xf32> to vector<1x32xf32>
    %173 = vector.extract_strided_slice %172 {offsets = [0, 0], sizes = [1, 16], strides = [1, 1]} : vector<1x32xf32> to vector<1x16xf32>
    %c4_87 = arith.constant 4 : index
    %c48_88 = arith.constant 48 : index
    %174 = vector.load %arg6[%c4_87, %c48_88] : memref<8x128xf32, #tpu.memory_space<vmem>>, vector<1x16xf32>
    tpu.vector_store %arg6[%c4_87, %c48_88], %173 {strides = array<i32>} : memref<8x128xf32, #tpu.memory_space<vmem>>, vector<1x16xf32>,
    %175 = vector.extract_strided_slice %172 {offsets = [0, 16], sizes = [1, 16], strides = [1, 1]} : vector<1x32xf32> to vector<1x16xf32>
    %c5_89 = arith.constant 5 : index
    %c48_90 = arith.constant 48 : index
    %176 = vector.load %arg6[%c5_89, %c48_90] : memref<8x128xf32, #tpu.memory_space<vmem>>, vector<1x16xf32>
    tpu.vector_store %arg6[%c5_89, %c48_90], %175 {strides = array<i32>} : memref<8x128xf32, #tpu.memory_space<vmem>>, vector<1x16xf32>,
    %177 = vector.extract_strided_slice %154 {offsets = [4, 0], sizes = [1, 32], strides = [1, 1]} : vector<8x32xf32> to vector<1x32xf32>
    %178 = vector.extract_strided_slice %177 {offsets = [0, 0], sizes = [1, 16], strides = [1, 1]} : vector<1x32xf32> to vector<1x16xf32>
    %c4_91 = arith.constant 4 : index
    %c64_92 = arith.constant 64 : index
    %179 = vector.load %arg6[%c4_91, %c64_92] : memref<8x128xf32, #tpu.memory_space<vmem>>, vector<1x16xf32>
    tpu.vector_store %arg6[%c4_91, %c64_92], %178 {strides = array<i32>} : memref<8x128xf32, #tpu.memory_space<vmem>>, vector<1x16xf32>,
    %180 = vector.extract_strided_slice %177 {offsets = [0, 16], sizes = [1, 16], strides = [1, 1]} : vector<1x32xf32> to vector<1x16xf32>
    %c5_93 = arith.constant 5 : index
    %c64_94 = arith.constant 64 : index
    %181 = vector.load %arg6[%c5_93, %c64_94] : memref<8x128xf32, #tpu.memory_space<vmem>>, vector<1x16xf32>
    tpu.vector_store %arg6[%c5_93, %c64_94], %180 {strides = array<i32>} : memref<8x128xf32, #tpu.memory_space<vmem>>, vector<1x16xf32>,
    %182 = vector.extract_strided_slice %154 {offsets = [5, 0], sizes = [1, 32], strides = [1, 1]} : vector<8x32xf32> to vector<1x32xf32>
    %183 = vector.extract_strided_slice %182 {offsets = [0, 0], sizes = [1, 16], strides = [1, 1]} : vector<1x32xf32> to vector<1x16xf32>
    %c4_95 = arith.constant 4 : index
    %c80_96 = arith.constant 80 : index
    %184 = vector.load %arg6[%c4_95, %c80_96] : memref<8x128xf32, #tpu.memory_space<vmem>>, vector<1x16xf32>
    tpu.vector_store %arg6[%c4_95, %c80_96], %183 {strides = array<i32>} : memref<8x128xf32, #tpu.memory_space<vmem>>, vector<1x16xf32>,
    %185 = vector.extract_strided_slice %182 {offsets = [0, 16], sizes = [1, 16], strides = [1, 1]} : vector<1x32xf32> to vector<1x16xf32>
    %c5_97 = arith.constant 5 : index
    %c80_98 = arith.constant 80 : index
    %186 = vector.load %arg6[%c5_97, %c80_98] : memref<8x128xf32, #tpu.memory_space<vmem>>, vector<1x16xf32>
    tpu.vector_store %arg6[%c5_97, %c80_98], %185 {strides = array<i32>} : memref<8x128xf32, #tpu.memory_space<vmem>>, vector<1x16xf32>,
    %187 = vector.extract_strided_slice %154 {offsets = [6, 0], sizes = [1, 32], strides = [1, 1]} : vector<8x32xf32> to vector<1x32xf32>
    %188 = vector.extract_strided_slice %187 {offsets = [0, 0], sizes = [1, 16], strides = [1, 1]} : vector<1x32xf32> to vector<1x16xf32>
    %c4_99 = arith.constant 4 : index
    %c96_100 = arith.constant 96 : index
    %189 = vector.load %arg6[%c4_99, %c96_100] : memref<8x128xf32, #tpu.memory_space<vmem>>, vector<1x16xf32>
    tpu.vector_store %arg6[%c4_99, %c96_100], %188 {strides = array<i32>} : memref<8x128xf32, #tpu.memory_space<vmem>>, vector<1x16xf32>,
    %190 = vector.extract_strided_slice %187 {offsets = [0, 16], sizes = [1, 16], strides = [1, 1]} : vector<1x32xf32> to vector<1x16xf32>
    %c5_101 = arith.constant 5 : index
    %c96_102 = arith.constant 96 : index
    %191 = vector.load %arg6[%c5_101, %c96_102] : memref<8x128xf32, #tpu.memory_space<vmem>>, vector<1x16xf32>
    tpu.vector_store %arg6[%c5_101, %c96_102], %190 {strides = array<i32>} : memref<8x128xf32, #tpu.memory_space<vmem>>, vector<1x16xf32>,
    %192 = vector.extract_strided_slice %154 {offsets = [7, 0], sizes = [1, 32], strides = [1, 1]} : vector<8x32xf32> to vector<1x32xf32>
    %193 = vector.extract_strided_slice %192 {offsets = [0, 0], sizes = [1, 16], strides = [1, 1]} : vector<1x32xf32> to vector<1x16xf32>
    %c4_103 = arith.constant 4 : index
    %c112_104 = arith.constant 112 : index
    %194 = vector.load %arg6[%c4_103, %c112_104] : memref<8x128xf32, #tpu.memory_space<vmem>>, vector<1x16xf32>
    tpu.vector_store %arg6[%c4_103, %c112_104], %193 {strides = array<i32>} : memref<8x128xf32, #tpu.memory_space<vmem>>, vector<1x16xf32>,
    %195 = vector.extract_strided_slice %192 {offsets = [0, 16], sizes = [1, 16], strides = [1, 1]} : vector<1x32xf32> to vector<1x16xf32>
    %c5_105 = arith.constant 5 : index
    %c112_106 = arith.constant 112 : index
    %196 = vector.load %arg6[%c5_105, %c112_106] : memref<8x128xf32, #tpu.memory_space<vmem>>, vector<1x16xf32>
    tpu.vector_store %arg6[%c5_105, %c112_106], %195 {strides = array<i32>} : memref<8x128xf32, #tpu.memory_space<vmem>>, vector<1x16xf32>,
    %197 = vector.extract_strided_slice %2 {offsets = [0, 384], sizes = [8, 128], strides = [1, 1]} : vector<8x512xf32> to vector<8x128xf32>
    %198 = vector.extract_strided_slice %197 {offsets = [0, 0], sizes = [8, 32], strides = [1, 1]} : vector<8x128xf32> to vector<8x32xf32>
    %199 = vector.extract_strided_slice %197 {offsets = [0, 32], sizes = [8, 32], strides = [1, 1]} : vector<8x128xf32> to vector<8x32xf32>
    %200 = arith.maximumf %198, %199 : vector<8x32xf32>
    %201 = vector.extract_strided_slice %197 {offsets = [0, 64], sizes = [8, 32], strides = [1, 1]} : vector<8x128xf32> to vector<8x32xf32>
    %202 = arith.maximumf %200, %201 : vector<8x32xf32>
    %203 = vector.extract_strided_slice %197 {offsets = [0, 96], sizes = [8, 32], strides = [1, 1]} : vector<8x128xf32> to vector<8x32xf32>
    %204 = arith.maximumf %202, %203 : vector<8x32xf32>
    %c0_107 = arith.constant 0 : index
    %c0_108 = arith.constant 0 : index
    %205 = vector.load %arg2[%c0_107, %c0_108] : memref<8x1xf32, #tpu.memory_space<vmem>>, vector<8x1xf32>
    %206 = vector.broadcast %205 : vector<8x1xf32> to vector<8x32xf32>
    %207 = arith.addf %204, %206 : vector<8x32xf32>
    %cst_109 = arith.constant 7.500000e-01 : f32
    %208 = vector.broadcast %cst_109 : f32 to vector<8x32xf32>
    %209 = arith.mulf %146, %208 : vector<8x32xf32>
    %210 = arith.addf %209, %207 : vector<8x32xf32>
    %211 = arith.subf %210, %156 : vector<8x32xf32>
    %cst_110 = arith.constant 5.000000e-01 : f32
    %212 = vector.broadcast %cst_110 : f32 to vector<8x32xf32>
    %213 = arith.mulf %211, %212 : vector<8x32xf32>
    %214 = arith.addf %156, %213 : vector<8x32xf32>
    %cst_111 = arith.constant 1.000000e+00 : f32
    %215 = vector.broadcast %cst_111 : f32 to vector<8x32xf32>
    %216 = arith.cmpf oge, %214, %215 : vector<8x32xf32>
    %217 = arith.extui %216 : vector<8x32xi1> to vector<8x32xi32>
    %218 = arith.sitofp %217 : vector<8x32xi32> to vector<8x32xf32>
    %219 = vector.extract_strided_slice %218 {offsets = [0, 0], sizes = [1, 32], strides = [1, 1]} : vector<8x32xf32> to vector<1x32xf32>
    %220 = vector.extract_strided_slice %219 {offsets = [0, 0], sizes = [1, 16], strides = [1, 1]} : vector<1x32xf32> to vector<1x16xf32>
    %c6 = arith.constant 6 : index
    %c0_112 = arith.constant 0 : index
    %221 = vector.load %arg6[%c6, %c0_112] : memref<8x128xf32, #tpu.memory_space<vmem>>, vector<1x16xf32>
    tpu.vector_store %arg6[%c6, %c0_112], %220 {strides = array<i32>} : memref<8x128xf32, #tpu.memory_space<vmem>>, vector<1x16xf32>,
    %222 = vector.extract_strided_slice %219 {offsets = [0, 16], sizes = [1, 16], strides = [1, 1]} : vector<1x32xf32> to vector<1x16xf32>
    %c7 = arith.constant 7 : index
    %c0_113 = arith.constant 0 : index
    %223 = vector.load %arg6[%c7, %c0_113] : memref<8x128xf32, #tpu.memory_space<vmem>>, vector<1x16xf32>
    tpu.vector_store %arg6[%c7, %c0_113], %222 {strides = array<i32>} : memref<8x128xf32, #tpu.memory_space<vmem>>, vector<1x16xf32>,
    %224 = vector.extract_strided_slice %218 {offsets = [1, 0], sizes = [1, 32], strides = [1, 1]} : vector<8x32xf32> to vector<1x32xf32>
    %225 = vector.extract_strided_slice %224 {offsets = [0, 0], sizes = [1, 16], strides = [1, 1]} : vector<1x32xf32> to vector<1x16xf32>
    %c6_114 = arith.constant 6 : index
    %c16_115 = arith.constant 16 : index
    %226 = vector.load %arg6[%c6_114, %c16_115] : memref<8x128xf32, #tpu.memory_space<vmem>>, vector<1x16xf32>
    tpu.vector_store %arg6[%c6_114, %c16_115], %225 {strides = array<i32>} : memref<8x128xf32, #tpu.memory_space<vmem>>, vector<1x16xf32>,
    %227 = vector.extract_strided_slice %224 {offsets = [0, 16], sizes = [1, 16], strides = [1, 1]} : vector<1x32xf32> to vector<1x16xf32>
    %c7_116 = arith.constant 7 : index
    %c16_117 = arith.constant 16 : index
    %228 = vector.load %arg6[%c7_116, %c16_117] : memref<8x128xf32, #tpu.memory_space<vmem>>, vector<1x16xf32>
    tpu.vector_store %arg6[%c7_116, %c16_117], %227 {strides = array<i32>} : memref<8x128xf32, #tpu.memory_space<vmem>>, vector<1x16xf32>,
    %229 = vector.extract_strided_slice %218 {offsets = [2, 0], sizes = [1, 32], strides = [1, 1]} : vector<8x32xf32> to vector<1x32xf32>
    %230 = vector.extract_strided_slice %229 {offsets = [0, 0], sizes = [1, 16], strides = [1, 1]} : vector<1x32xf32> to vector<1x16xf32>
    %c6_118 = arith.constant 6 : index
    %c32_119 = arith.constant 32 : index
    %231 = vector.load %arg6[%c6_118, %c32_119] : memref<8x128xf32, #tpu.memory_space<vmem>>, vector<1x16xf32>
    tpu.vector_store %arg6[%c6_118, %c32_119], %230 {strides = array<i32>} : memref<8x128xf32, #tpu.memory_space<vmem>>, vector<1x16xf32>,
    %232 = vector.extract_strided_slice %229 {offsets = [0, 16], sizes = [1, 16], strides = [1, 1]} : vector<1x32xf32> to vector<1x16xf32>
    %c7_120 = arith.constant 7 : index
    %c32_121 = arith.constant 32 : index
    %233 = vector.load %arg6[%c7_120, %c32_121] : memref<8x128xf32, #tpu.memory_space<vmem>>, vector<1x16xf32>
    tpu.vector_store %arg6[%c7_120, %c32_121], %232 {strides = array<i32>} : memref<8x128xf32, #tpu.memory_space<vmem>>, vector<1x16xf32>,
    %234 = vector.extract_strided_slice %218 {offsets = [3, 0], sizes = [1, 32], strides = [1, 1]} : vector<8x32xf32> to vector<1x32xf32>
    %235 = vector.extract_strided_slice %234 {offsets = [0, 0], sizes = [1, 16], strides = [1, 1]} : vector<1x32xf32> to vector<1x16xf32>
    %c6_122 = arith.constant 6 : index
    %c48_123 = arith.constant 48 : index
    %236 = vector.load %arg6[%c6_122, %c48_123] : memref<8x128xf32, #tpu.memory_space<vmem>>, vector<1x16xf32>
    tpu.vector_store %arg6[%c6_122, %c48_123], %235 {strides = array<i32>} : memref<8x128xf32, #tpu.memory_space<vmem>>, vector<1x16xf32>,
    %237 = vector.extract_strided_slice %234 {offsets = [0, 16], sizes = [1, 16], strides = [1, 1]} : vector<1x32xf32> to vector<1x16xf32>
    %c7_124 = arith.constant 7 : index
    %c48_125 = arith.constant 48 : index
    %238 = vector.load %arg6[%c7_124, %c48_125] : memref<8x128xf32, #tpu.memory_space<vmem>>, vector<1x16xf32>
    tpu.vector_store %arg6[%c7_124, %c48_125], %237 {strides = array<i32>} : memref<8x128xf32, #tpu.memory_space<vmem>>, vector<1x16xf32>,
    %239 = vector.extract_strided_slice %218 {offsets = [4, 0], sizes = [1, 32], strides = [1, 1]} : vector<8x32xf32> to vector<1x32xf32>
    %240 = vector.extract_strided_slice %239 {offsets = [0, 0], sizes = [1, 16], strides = [1, 1]} : vector<1x32xf32> to vector<1x16xf32>
    %c6_126 = arith.constant 6 : index
    %c64_127 = arith.constant 64 : index
    %241 = vector.load %arg6[%c6_126, %c64_127] : memref<8x128xf32, #tpu.memory_space<vmem>>, vector<1x16xf32>
    tpu.vector_store %arg6[%c6_126, %c64_127], %240 {strides = array<i32>} : memref<8x128xf32, #tpu.memory_space<vmem>>, vector<1x16xf32>,
    %242 = vector.extract_strided_slice %239 {offsets = [0, 16], sizes = [1, 16], strides = [1, 1]} : vector<1x32xf32> to vector<1x16xf32>
    %c7_128 = arith.constant 7 : index
    %c64_129 = arith.constant 64 : index
    %243 = vector.load %arg6[%c7_128, %c64_129] : memref<8x128xf32, #tpu.memory_space<vmem>>, vector<1x16xf32>
    tpu.vector_store %arg6[%c7_128, %c64_129], %242 {strides = array<i32>} : memref<8x128xf32, #tpu.memory_space<vmem>>, vector<1x16xf32>,
    %244 = vector.extract_strided_slice %218 {offsets = [5, 0], sizes = [1, 32], strides = [1, 1]} : vector<8x32xf32> to vector<1x32xf32>
    %245 = vector.extract_strided_slice %244 {offsets = [0, 0], sizes = [1, 16], strides = [1, 1]} : vector<1x32xf32> to vector<1x16xf32>
    %c6_130 = arith.constant 6 : index
    %c80_131 = arith.constant 80 : index
    %246 = vector.load %arg6[%c6_130, %c80_131] : memref<8x128xf32, #tpu.memory_space<vmem>>, vector<1x16xf32>
    tpu.vector_store %arg6[%c6_130, %c80_131], %245 {strides = array<i32>} : memref<8x128xf32, #tpu.memory_space<vmem>>, vector<1x16xf32>,
    %247 = vector.extract_strided_slice %244 {offsets = [0, 16], sizes = [1, 16], strides = [1, 1]} : vector<1x32xf32> to vector<1x16xf32>
    %c7_132 = arith.constant 7 : index
    %c80_133 = arith.constant 80 : index
    %248 = vector.load %arg6[%c7_132, %c80_133] : memref<8x128xf32, #tpu.memory_space<vmem>>, vector<1x16xf32>
    tpu.vector_store %arg6[%c7_132, %c80_133], %247 {strides = array<i32>} : memref<8x128xf32, #tpu.memory_space<vmem>>, vector<1x16xf32>,
    %249 = vector.extract_strided_slice %218 {offsets = [6, 0], sizes = [1, 32], strides = [1, 1]} : vector<8x32xf32> to vector<1x32xf32>
    %250 = vector.extract_strided_slice %249 {offsets = [0, 0], sizes = [1, 16], strides = [1, 1]} : vector<1x32xf32> to vector<1x16xf32>
    %c6_134 = arith.constant 6 : index
    %c96_135 = arith.constant 96 : index
    %251 = vector.load %arg6[%c6_134, %c96_135] : memref<8x128xf32, #tpu.memory_space<vmem>>, vector<1x16xf32>
    tpu.vector_store %arg6[%c6_134, %c96_135], %250 {strides = array<i32>} : memref<8x128xf32, #tpu.memory_space<vmem>>, vector<1x16xf32>,
    %252 = vector.extract_strided_slice %249 {offsets = [0, 16], sizes = [1, 16], strides = [1, 1]} : vector<1x32xf32> to vector<1x16xf32>
    %c7_136 = arith.constant 7 : index
    %c96_137 = arith.constant 96 : index
    %253 = vector.load %arg6[%c7_136, %c96_137] : memref<8x128xf32, #tpu.memory_space<vmem>>, vector<1x16xf32>
    tpu.vector_store %arg6[%c7_136, %c96_137], %252 {strides = array<i32>} : memref<8x128xf32, #tpu.memory_space<vmem>>, vector<1x16xf32>,
    %254 = vector.extract_strided_slice %218 {offsets = [7, 0], sizes = [1, 32], strides = [1, 1]} : vector<8x32xf32> to vector<1x32xf32>
    %255 = vector.extract_strided_slice %254 {offsets = [0, 0], sizes = [1, 16], strides = [1, 1]} : vector<1x32xf32> to vector<1x16xf32>
    %c6_138 = arith.constant 6 : index
    %c112_139 = arith.constant 112 : index
    %256 = vector.load %arg6[%c6_138, %c112_139] : memref<8x128xf32, #tpu.memory_space<vmem>>, vector<1x16xf32>
    tpu.vector_store %arg6[%c6_138, %c112_139], %255 {strides = array<i32>} : memref<8x128xf32, #tpu.memory_space<vmem>>, vector<1x16xf32>,
    %257 = vector.extract_strided_slice %254 {offsets = [0, 16], sizes = [1, 16], strides = [1, 1]} : vector<1x32xf32> to vector<1x16xf32>
    %c7_140 = arith.constant 7 : index
    %c112_141 = arith.constant 112 : index
    %258 = vector.load %arg6[%c7_140, %c112_141] : memref<8x128xf32, #tpu.memory_space<vmem>>, vector<1x16xf32>
    tpu.vector_store %arg6[%c7_140, %c112_141], %257 {strides = array<i32>} : memref<8x128xf32, #tpu.memory_space<vmem>>, vector<1x16xf32>,
    %c0_142 = arith.constant 0 : index
    %c0_143 = arith.constant 0 : index
    %259 = vector.load %arg6[%c0_142, %c0_143] : memref<8x128xf32, #tpu.memory_space<vmem>>, vector<8x128xf32>
    %260 = arith.truncf %259 : vector<8x128xf32> to vector<8x128xbf16>
    %c0_144 = arith.constant 0 : index
    %c0_145 = arith.constant 0 : index
    %261 = vector.load %arg3[%c0_144, %c0_145] : memref<128x10xbf16, #tpu.memory_space<vmem>>, vector<128x10xbf16>
    %cst_146 = arith.constant dense<0.000000e+00> : vector<8x10xf32>
    %262 = tpu.matmul %260, %261, %cst_146 {dimension_numbers = #tpu.dot_dimension_numbers<[1], [0], [0], [1], [0, 0, 1, 1], [], []>} : vector<8x128xbf16>, vector<128x10xbf16>, vector<8x10xf32> -> vector<8x10xf32>
    %c0_147 = arith.constant 0 : index
    %c0_148 = arith.constant 0 : index
    %263 = vector.load %arg4[%c0_147, %c0_148] : memref<1x10xf32, #tpu.memory_space<vmem>>, vector<1x10xf32>
    %264 = vector.broadcast %263 : vector<1x10xf32> to vector<8x10xf32>
    %265 = arith.addf %262, %264 : vector<8x10xf32>
    %cst_149 = arith.constant 0.000000e+00 : f32
    %266 = vector.broadcast %cst_149 : f32 to vector<2x10xf32>
    %cst_150 = arith.constant 0.000000e+00 : f32
    %267 = vector.broadcast %cst_150 : f32 to vector<2x10xf32>
    %268 = vector.extract_strided_slice %265 {offsets = [0, 0], sizes = [2, 10], strides = [1, 1]} : vector<8x10xf32> to vector<2x10xf32>
    %269 = arith.subf %268, %266 : vector<2x10xf32>
    %cst_151 = arith.constant 5.000000e-01 : f32
    %270 = vector.broadcast %cst_151 : f32 to vector<2x10xf32>
    %271 = arith.mulf %269, %270 : vector<2x10xf32>
    %272 = arith.addf %266, %271 : vector<2x10xf32>
    %cst_152 = arith.constant 1.000000e+00 : f32
    %273 = vector.broadcast %cst_152 : f32 to vector<2x10xf32>
    %274 = arith.cmpf oge, %272, %273 : vector<2x10xf32>
    %275 = arith.extui %274 : vector<2x10xi1> to vector<2x10xi32>
    %276 = arith.sitofp %275 : vector<2x10xi32> to vector<2x10xf32>
    %277 = arith.addf %267, %276 : vector<2x10xf32>
    %cst_153 = arith.constant 0.000000e+00 : f32
    %278 = vector.broadcast %cst_153 : f32 to vector<2x10xf32>
    %279 = arith.select %274, %278, %272 : vector<2x10xi1>, vector<2x10xf32>
    %280 = vector.extract_strided_slice %265 {offsets = [2, 0], sizes = [2, 10], strides = [1, 1]} : vector<8x10xf32> to vector<2x10xf32>
    %281 = arith.subf %280, %279 : vector<2x10xf32>
    %cst_154 = arith.constant 5.000000e-01 : f32
    %282 = vector.broadcast %cst_154 : f32 to vector<2x10xf32>
    %283 = arith.mulf %281, %282 : vector<2x10xf32>
    %284 = arith.addf %279, %283 : vector<2x10xf32>
    %cst_155 = arith.constant 1.000000e+00 : f32
    %285 = vector.broadcast %cst_155 : f32 to vector<2x10xf32>
    %286 = arith.cmpf oge, %284, %285 : vector<2x10xf32>
    %287 = arith.extui %286 : vector<2x10xi1> to vector<2x10xi32>
    %288 = arith.sitofp %287 : vector<2x10xi32> to vector<2x10xf32>
    %289 = arith.addf %277, %288 : vector<2x10xf32>
    %cst_156 = arith.constant 0.000000e+00 : f32
    %290 = vector.broadcast %cst_156 : f32 to vector<2x10xf32>
    %291 = arith.select %286, %290, %284 : vector<2x10xi1>, vector<2x10xf32>
    %292 = vector.extract_strided_slice %265 {offsets = [4, 0], sizes = [2, 10], strides = [1, 1]} : vector<8x10xf32> to vector<2x10xf32>
    %293 = arith.subf %292, %291 : vector<2x10xf32>
    %cst_157 = arith.constant 5.000000e-01 : f32
    %294 = vector.broadcast %cst_157 : f32 to vector<2x10xf32>
    %295 = arith.mulf %293, %294 : vector<2x10xf32>
    %296 = arith.addf %291, %295 : vector<2x10xf32>
    %cst_158 = arith.constant 1.000000e+00 : f32
    %297 = vector.broadcast %cst_158 : f32 to vector<2x10xf32>
    %298 = arith.cmpf oge, %296, %297 : vector<2x10xf32>
    %299 = arith.extui %298 : vector<2x10xi1> to vector<2x10xi32>
    %300 = arith.sitofp %299 : vector<2x10xi32> to vector<2x10xf32>
    %301 = arith.addf %289, %300 : vector<2x10xf32>
    %cst_159 = arith.constant 0.000000e+00 : f32
    %302 = vector.broadcast %cst_159 : f32 to vector<2x10xf32>
    %303 = arith.select %298, %302, %296 : vector<2x10xi1>, vector<2x10xf32>
    %304 = vector.extract_strided_slice %265 {offsets = [6, 0], sizes = [2, 10], strides = [1, 1]} : vector<8x10xf32> to vector<2x10xf32>
    %305 = arith.subf %304, %303 : vector<2x10xf32>
    %cst_160 = arith.constant 5.000000e-01 : f32
    %306 = vector.broadcast %cst_160 : f32 to vector<2x10xf32>
    %307 = arith.mulf %305, %306 : vector<2x10xf32>
    %308 = arith.addf %303, %307 : vector<2x10xf32>
    %cst_161 = arith.constant 1.000000e+00 : f32
    %309 = vector.broadcast %cst_161 : f32 to vector<2x10xf32>
    %310 = arith.cmpf oge, %308, %309 : vector<2x10xf32>
    %311 = arith.extui %310 : vector<2x10xi1> to vector<2x10xi32>
    %312 = arith.sitofp %311 : vector<2x10xi32> to vector<2x10xf32>
    %313 = arith.addf %301, %312 : vector<2x10xf32>
    %cst_162 = arith.constant 2.500000e-01 : f32
    %314 = vector.broadcast %cst_162 : f32 to vector<2x10xf32>
    %315 = arith.mulf %313, %314 : vector<2x10xf32>
    %c0_163 = arith.constant 0 : index
    %c0_164 = arith.constant 0 : index
    %316 = vector.load %arg5[%c0_163, %c0_164] : memref<2x10xf32, #tpu.memory_space<vmem>>, vector<2x10xf32>
    tpu.vector_store %arg5[%c0_163, %c0_164], %315 {strides = array<i32>} : memref<2x10xf32, #tpu.memory_space<vmem>>, vector<2x10xf32>,
    return
  }
}

</mosaic_0001>

<llo_original>
// kernel: casddtp_csnn_forward.2
$region0: #{casddtp_csnn_forward.2}
  #allocation0 [shape = 'u32[]', space=smem, size = 0x4, offset = 0x4, fixed_abs, tag = 'smem constant byte address 0x4 - core index']
  #allocation1 [shape = 'u32[144,128]{1,0:T(1,128)}', space=vmem, size = 0x12000, scoped, tag = 'internal scratch']
  %s0 = inlined_call_operand.vmem [shape: bf16[25,1152], index: 0, kind: input, shape index: {}]
  %s1 = inlined_call_operand.vmem [shape: bf16[4,25], index: 1, kind: input, shape index: {}]
  %s2 = inlined_call_operand.vmem [shape: f32[4,1], index: 2, kind: input, shape index: {}]
  %s3 = inlined_call_operand.vmem [shape: bf16[4,4,288], index: 3, kind: output, shape index: {}]
  %s4 = sld [smem:[#allocation0]]
  $region22: #{casddtp_csnn_forward.2} parent=0
    _
  %s6 = ssub.s32 1, %s4
  %s7 = scalar_select 0, %s6, %s4
  // Predicated region
  $region2: #{casddtp_csnn_forward.2} parent=0 // pred_check
    _
  $region3: #{casddtp_csnn_forward.2} parent=0 // pred_check_branch
    %9 = sbr.rel (0) target = $region5
  $region4: #{casddtp_csnn_forward.2} parent=0 // pred_region
    _
  $region5: #{casddtp_csnn_forward.2} parent=0 // pred_fallthru
    _
  // Predicated region
  $region6: #{casddtp_csnn_forward.2} parent=0 // pred_check
    _
  $region7: #{casddtp_csnn_forward.2} parent=0 // pred_check_branch
    %11 = sbr.rel (0) target = $region9
  $region8: #{casddtp_csnn_forward.2} parent=0 // pred_region
    _
  $region9: #{casddtp_csnn_forward.2} parent=0 // pred_fallthru
    _
  // Predicated region
  $region10: #{casddtp_csnn_forward.2} parent=0 // pred_check
    _
  $region11: #{casddtp_csnn_forward.2} parent=0 // pred_check_branch
    %13 = sbr.rel (0) target = $region13
  $region12: #{casddtp_csnn_forward.2} parent=0 // pred_region
    _
  $region13: #{casddtp_csnn_forward.2} parent=0 // pred_fallthru
    _
  %v15 = vld [vmem:[%s1] sm:$0x3]
  %v16 = vld [vmem:[%s0] sm:$0xff]
  %v17 = vld [vmem:[%s0 + $0x8] sm:$0xff]
  %v18 = vld [vmem:[%s0 + $0x10] sm:$0xff]
  %v19 = vld [vmem:[%s0 + $0x18] sm:$0xff]
  %v20 = vld [vmem:[%s0 + $0x20] sm:$0xf]
  %v21 = vld [vmem:[%s0 + $0x24] sm:$0xff]
  %v22 = vld [vmem:[%s0 + $0x2c] sm:$0xff]
  %v23 = vld [vmem:[%s0 + $0x34] sm:$0xff]
  %v24 = vld [vmem:[%s0 + $0x3c] sm:$0xff]
  %v25 = vld [vmem:[%s0 + $0x44] sm:$0xf]
  %v26 = vld [vmem:[%s0 + $0x48] sm:$0xff]
  %v27 = vld [vmem:[%s0 + $0x50] sm:$0xff]
  %v28 = vld [vmem:[%s0 + $0x58] sm:$0xff]
  %v29 = vld [vmem:[%s0 + $0x60] sm:$0xff]
  %v30 = vld [vmem:[%s0 + $0x68] sm:$0xf]
  %v31 = vld [vmem:[%s0 + $0x6c] sm:$0x11]
  %v32 = vld [vmem:[%s0 + $0x74] sm:$0x11]
  %v33 = vld [vmem:[%s0 + $0x7c] sm:$0x11]
  %v34 = vld [vmem:[%s0 + $0x84] sm:$0x11]
  %v35 = vld [vmem:[%s0 + $0x8c] sm:$0x1]
  %v56 = vunpack.c.l.b16 %v16
  %v57 = vunpack.c.h.b16 %v16
  %v58 = vunpack.c.l.b16 %v17
  %v59 = vunpack.c.h.b16 %v17
  %v60 = vunpack.c.l.b16 %v18
  %v61 = vunpack.c.h.b16 %v18
  %v62 = vunpack.c.l.b16 %v19
  %v63 = vunpack.c.h.b16 %v19
  %v64 = vunpack.c.l.b16 %v20
  %v65 = vunpack.c.l.b16 %v21
  %v66 = vunpack.c.h.b16 %v21
  %v67 = vunpack.c.l.b16 %v22
  %v68 = vunpack.c.h.b16 %v22
  %v69 = vunpack.c.l.b16 %v23
  %v70 = vunpack.c.h.b16 %v23
  %v71 = vunpack.c.l.b16 %v24
  %v72 = vunpack.c.h.b16 %v24
  %v73 = vunpack.c.l.b16 %v25
  %v74 = vunpack.c.l.b16 %v26
  %v75 = vunpack.c.h.b16 %v26
  %v76 = vunpack.c.l.b16 %v27
  %v77 = vunpack.c.h.b16 %v27
  %v78 = vunpack.c.l.b16 %v28
  %v79 = vunpack.c.h.b16 %v28
  %v80 = vunpack.c.l.b16 %v29
  %v81 = vunpack.c.h.b16 %v29
  %v82 = vunpack.c.l.b16 %v30
  %v83 = vunpack.c.l.b16 %v31
  %v84 = vunpack.c.h.b16 %v31
  %v85 = vunpack.c.l.b16 %v32
  %v86 = vunpack.c.h.b16 %v32
  %v87 = vunpack.c.l.b16 %v33
  %v88 = vunpack.c.h.b16 %v33
  %v89 = vunpack.c.l.b16 %v34
  %v90 = vunpack.c.h.b16 %v34
  %v91 = vunpack.c.l.b16 %v35
  %v92 = vpack.c.b16 %v65, %v56
  %v93 = vpack.c.b16 %v66, %v57
  %v94 = vpack.c.b16 %v67, %v58
  %v95 = vpack.c.b16 %v68, %v59
  %v96 = vpack.c.b16 %v69, %v60
  %v97 = vpack.c.b16 %v70, %v61
  %v98 = vpack.c.b16 %v71, %v62
  %v99 = vpack.c.b16 %v72, %v63
  %v100 = vpack.c.b16 %v73, %v64
  %v101 = vpack.c.b16 %v83, %v74
  %v102 = vpack.c.b16 %v84, %v75
  %v103 = vpack.c.b16 %v85, %v76
  %v104 = vpack.c.b16 %v86, %v77
  %v105 = vpack.c.b16 %v87, %v78
  %v106 = vpack.c.b16 %v88, %v79
  %v107 = vpack.c.b16 %v89, %v80
  %v108 = vpack.c.b16 %v90, %v81
  %v109 = vpack.c.b16 %v91, %v82
  %vm119 = vcmask 203776
  %v121 = vsel %vm119, %v15, 0
  %vm123 = vcmask 1043456
  %vm124 = vcmask 1044480
  %v125 = vsel %vm123, 4294967295, 65535
  %v126 = vsel %vm124, %v125, 0
  %v128 = vand.u32 %v101, %v126
  %v131 = vand.u32 %v102, %v126
  %v134 = vand.u32 %v103, %v126
  %v137 = vand.u32 %v104, %v126
  %v140 = vand.u32 %v105, %v126
  %v143 = vand.u32 %v106, %v126
  %v146 = vand.u32 %v107, %v126
  %v149 = vand.u32 %v108, %v126
  %v152 = vand.u32 %v109, %v126
  %154 = vmatprep.subr.bf16.mxu0 %v93
  %155 = vmatpush1.bf16.msra.mxu0 %v92
  %156 = vmatprep.subr.bf16.mxu0 %v131
  %157 = vmatpush1.bf16.msra.mxu0 %v128
  %158 = vmatprep.subr.bf16.mxu0 0
  %159 = vmatpush1.bf16.msra.mxu0 0
  %160 = vmatprep.subr.bf16.mxu0 0
  %161 = vmatpush1.bf16.msra.mxu0 0
  %162 = vmatprep.subr.bf16.mxu0 0
  %163 = vmatpush1.bf16.msra.mxu0 0
  %164 = vmatprep.subr.bf16.mxu0 0
  %165 = vmatpush1.bf16.msra.mxu0 0
  %166 = vmatprep.subr.bf16.mxu0 0
  %167 = vmatpush1.bf16.msra.mxu0 0
  %168 = vmatprep.subr.bf16.mxu0 0
  %169 = vmatpush1.bf16.msra.mxu0 0
  %170 = vmatprep.subr.bf16.mxu0 0
  %171 = vmatpush1.bf16.msra.mxu0 0
  %172 = vmatprep.subr.bf16.mxu0 0
  %173 = vmatpush1.bf16.msra.mxu0 0
  %174 = vmatprep.subr.bf16.mxu0 0
  %175 = vmatpush1.bf16.msra.mxu0 0
  %176 = vmatprep.subr.bf16.mxu0 0
  %177 = vmatpush1.bf16.msra.mxu0 0
  %178 = vmatprep.subr.bf16.mxu0 0
  %179 = vmatpush1.bf16.msra.mxu0 0
  %180 = vmatprep.subr.bf16.mxu0 0
  %181 = vmatpush1.bf16.msra.mxu0 0
  %182 = vmatprep.subr.bf16.mxu0 0
  %183 = vmatpush1.bf16.msra.mxu0 0
  %184 = vmatprep.subr.bf16.mxu0 0
  %185 = vmatpush1.bf16.msra.mxu0 0
  %186 = vmatprep.mubr.bf16.mxu0 0
  %187 = vmatmul.mubr.bf16.gmra.mrb[0].mxu0 %v121
  %v188 = vpop.f32.mrb[0].mxu0
  %v189 = vadd.f32 0.0, %v188
  %v190 = vpop.f32.mrb[0].mxu0
  %v191 = vadd.f32 0.0, %v190
  %v192 = vpop.f32.mrb[0].mxu0
  %v193 = vpop.f32.mrb[0].mxu0
  %194 = vdwg.mxu0
  %195 = vmatprep.subr.bf16.mxu0 %v95
  %196 = vmatpush1.bf16.msra.mxu0 %v94
  %197 = vmatprep.subr.bf16.mxu0 %v137
  %198 = vmatpush1.bf16.msra.mxu0 %v134
  %199 = vmatprep.subr.bf16.mxu0 0
  %200 = vmatpush1.bf16.msra.mxu0 0
  %201 = vmatprep.subr.bf16.mxu0 0
  %202 = vmatpush1.bf16.msra.mxu0 0
  %203 = vmatprep.subr.bf16.mxu0 0
  %204 = vmatpush1.bf16.msra.mxu0 0
  %205 = vmatprep.subr.bf16.mxu0 0
  %206 = vmatpush1.bf16.msra.mxu0 0
  %207 = vmatprep.subr.bf16.mxu0 0
  %208 = vmatpush1.bf16.msra.mxu0 0
  %209 = vmatprep.subr.bf16.mxu0 0
  %210 = vmatpush1.bf16.msra.mxu0 0
  %211 = vmatprep.subr.bf16.mxu0 0
  %212 = vmatpush1.bf16.msra.mxu0 0
  %213 = vmatprep.subr.bf16.mxu0 0
  %214 = vmatpush1.bf16.msra.mxu0 0
  %215 = vmatprep.subr.bf16.mxu0 0
  %216 = vmatpush1.bf16.msra.mxu0 0
  %217 = vmatprep.subr.bf16.mxu0 0
  %218 = vmatpush1.bf16.msra.mxu0 0
  %219 = vmatprep.subr.bf16.mxu0 0
  %220 = vmatpush1.bf16.msra.mxu0 0
  %221 = vmatprep.subr.bf16.mxu0 0
  %222 = vmatpush1.bf16.msra.mxu0 0
  %223 = vmatprep.subr.bf16.mxu0 0
  %224 = vmatpush1.bf16.msra.mxu0 0
  %225 = vmatprep.subr.bf16.mxu0 0
  %226 = vmatpush1.bf16.msra.mxu0 0
  %227 = vmatprep.mubr.bf16.mxu0 0
  %228 = vmatmul.mubr.bf16.gmra.mrb[0].mxu0 %v121
  %v229 = vpop.f32.mrb[0].mxu0
  %v230 = vadd.f32 0.0, %v229
  %v231 = vpop.f32.mrb[0].mxu0
  %v232 = vadd.f32 0.0, %v231
  %v233 = vpop.f32.mrb[0].mxu0
  %v234 = vpop.f32.mrb[0].mxu0
  %235 = vdwg.mxu0
  %236 = vmatprep.subr.bf16.mxu0 %v97
  %237 = vmatpush1.bf16.msra.mxu0 %v96
  %238 = vmatprep.subr.bf16.mxu0 %v143
  %239 = vmatpush1.bf16.msra.mxu0 %v140
  %240 = vmatprep.subr.bf16.mxu0 0
  %241 = vmatpush1.bf16.msra.mxu0 0
  %242 = vmatprep.subr.bf16.mxu0 0
  %243 = vmatpush1.bf16.msra.mxu0 0
  %244 = vmatprep.subr.bf16.mxu0 0
  %245 = vmatpush1.bf16.msra.mxu0 0
  %246 = vmatprep.subr.bf16.mxu0 0
  %247 = vmatpush1.bf16.msra.mxu0 0
  %248 = vmatprep.subr.bf16.mxu0 0
  %249 = vmatpush1.bf16.msra.mxu0 0
  %250 = vmatprep.subr.bf16.mxu0 0
  %251 = vmatpush1.bf16.msra.mxu0 0
  %252 = vmatprep.subr.bf16.mxu0 0
  %253 = vmatpush1.bf16.msra.mxu0 0
  %254 = vmatprep.subr.bf16.mxu0 0
  %255 = vmatpush1.bf16.msra.mxu0 0
  %256 = vmatprep.subr.bf16.mxu0 0
  %257 = vmatpush1.bf16.msra.mxu0 0
  %258 = vmatprep.subr.bf16.mxu0 0
  %259 = vmatpush1.bf16.msra.mxu0 0
  %260 = vmatprep.subr.bf16.mxu0 0
  %261 = vmatpush1.bf16.msra.mxu0 0
  %262 = vmatprep.subr.bf16.mxu0 0
  %263 = vmatpush1.bf16.msra.mxu0 0
  %264 = vmatprep.subr.bf16.mxu0 0
  %265 = vmatpush1.bf16.msra.mxu0 0
  %266 = vmatprep.subr.bf16.mxu0 0
  %267 = vmatpush1.bf16.msra.mxu0 0
  %268 = vmatprep.mubr.bf16.mxu0 0
  %269 = vmatmul.mubr.bf16.gmra.mrb[0].mxu0 %v121
  %v270 = vpop.f32.mrb[0].mxu0
  %v271 = vadd.f32 0.0, %v270
  %v272 = vpop.f32.mrb[0].mxu0
  %v273 = vadd.f32 0.0, %v272
  %v274 = vpop.f32.mrb[0].mxu0
  %v275 = vpop.f32.mrb[0].mxu0
  %276 = vdwg.mxu0
  %277 = vmatprep.subr.bf16.mxu0 %v99
  %278 = vmatpush1.bf16.msra.mxu0 %v98
  %279 = vmatprep.subr.bf16.mxu0 %v149
  %280 = vmatpush1.bf16.msra.mxu0 %v146
  %281 = vmatprep.subr.bf16.mxu0 0
  %282 = vmatpush1.bf16.msra.mxu0 0
  %283 = vmatprep.subr.bf16.mxu0 0
  %284 = vmatpush1.bf16.msra.mxu0 0
  %285 = vmatprep.subr.bf16.mxu0 0
  %286 = vmatpush1.bf16.msra.mxu0 0
  %287 = vmatprep.subr.bf16.mxu0 0
  %288 = vmatpush1.bf16.msra.mxu0 0
  %289 = vmatprep.subr.bf16.mxu0 0
  %290 = vmatpush1.bf16.msra.mxu0 0
  %291 = vmatprep.subr.bf16.mxu0 0
  %292 = vmatpush1.bf16.msra.mxu0 0
  %293 = vmatprep.subr.bf16.mxu0 0
  %294 = vmatpush1.bf16.msra.mxu0 0
  %295 = vmatprep.subr.bf16.mxu0 0
  %296 = vmatpush1.bf16.msra.mxu0 0
  %297 = vmatprep.subr.bf16.mxu0 0
  %298 = vmatpush1.bf16.msra.mxu0 0
  %299 = vmatprep.subr.bf16.mxu0 0
  %300 = vmatpush1.bf16.msra.mxu0 0
  %301 = vmatprep.subr.bf16.mxu0 0
  %302 = vmatpush1.bf16.msra.mxu0 0
  %303 = vmatprep.subr.bf16.mxu0 0
  %304 = vmatpush1.bf16.msra.mxu0 0
  %305 = vmatprep.subr.bf16.mxu0 0
  %306 = vmatpush1.bf16.msra.mxu0 0
  %307 = vmatprep.subr.bf16.mxu0 0
  %308 = vmatpush1.bf16.msra.mxu0 0
  %309 = vmatprep.mubr.bf16.mxu0 0
  %310 = vmatmul.mubr.bf16.gmra.mrb[0].mxu0 %v121
  %v311 = vpop.f32.mrb[0].mxu0
  %v312 = vadd.f32 0.0, %v311
  %v313 = vpop.f32.mrb[0].mxu0
  %v314 = vadd.f32 0.0, %v313
  %v315 = vpop.f32.mrb[0].mxu0
  %v316 = vpop.f32.mrb[0].mxu0
  %317 = vdwg.mxu0
  %318 = vmatprep.subr.bf16.mxu0 0
  %319 = vmatpush1.bf16.msra.mxu0 %v100
  %320 = vmatprep.subr.bf16.mxu0 0
  %321 = vmatpush1.bf16.msra.mxu0 %v152
  %322 = vmatprep.subr.bf16.mxu0 0
  %323 = vmatpush1.bf16.msra.mxu0 0
  %324 = vmatprep.subr.bf16.mxu0 0
  %325 = vmatpush1.bf16.msra.mxu0 0
  %326 = vmatprep.subr.bf16.mxu0 0
  %327 = vmatpush1.bf16.msra.mxu0 0
  %328 = vmatprep.subr.bf16.mxu0 0
  %329 = vmatpush1.bf16.msra.mxu0 0
  %330 = vmatprep.subr.bf16.mxu0 0
  %331 = vmatpush1.bf16.msra.mxu0 0
  %332 = vmatprep.subr.bf16.mxu0 0
  %333 = vmatpush1.bf16.msra.mxu0 0
  %334 = vmatprep.subr.bf16.mxu0 0
  %335 = vmatpush1.bf16.msra.mxu0 0
  %336 = vmatprep.subr.bf16.mxu0 0
  %337 = vmatpush1.bf16.msra.mxu0 0
  %338 = vmatprep.subr.bf16.mxu0 0
  %339 = vmatpush1.bf16.msra.mxu0 0
  %340 = vmatprep.subr.bf16.mxu0 0
  %341 = vmatpush1.bf16.msra.mxu0 0
  %342 = vmatprep.subr.bf16.mxu0 0
  %343 = vmatpush1.bf16.msra.mxu0 0
  %344 = vmatprep.subr.bf16.mxu0 0
  %345 = vmatpush1.bf16.msra.mxu0 0
  %346 = vmatprep.subr.bf16.mxu0 0
  %347 = vmatpush1.bf16.msra.mxu0 0
  %348 = vmatprep.subr.bf16.mxu0 0
  %349 = vmatpush1.bf16.msra.mxu0 0
  %350 = vmatprep.mubr.bf16.mxu0 0
  %351 = vmatmul.mubr.bf16.gmra.mrb[0].mxu0 %v121
  %v352 = vpop.f32.mrb[0].mxu0
  %v353 = vadd.f32 0.0, %v352
  %v354 = vpop.f32.mrb[0].mxu0
  %v355 = vpop.f32.mrb[0].mxu0
  %v356 = vpop.f32.mrb[0].mxu0
  %357 = vdwg.mxu0
  %361 = vrot.lane.b32.xlu0 %v230, 96
  %v362 = vpop.permute.xlu0 %361
  %363 = vrot.lane.b32.xlu0 %v232, 96
  %v364 = vpop.permute.xlu0 %363
  %365 = vrot.lane.b32.xlu0 %v271, 96
  %v366 = vpop.permute.xlu0 %365
  %vm367 = vcmask 785408
  %v368 = vsel %vm367, %v362, %v364
  %v369 = vsel %vm367, %v364, %v366
  %v373 = vmax.f32 %v189, %v368
  %v374 = vmax.f32 %v191, %v369
  %v375 = vmax.f32 %v230, %v366
  %378 = vrot.lane.b32.xlu0 %v271, 64
  %v379 = vpop.permute.xlu0 %378
  %380 = vrot.lane.b32.xlu0 %v273, 64
  %v381 = vpop.permute.xlu0 %380
  %382 = vrot.lane.b32.xlu0 %v312, 64
  %v383 = vpop.permute.xlu0 %382
  %vm384 = vcmask 523264
  %v385 = vsel %vm384, %v379, %v381
  %v386 = vsel %vm384, %v381, %v383
  %v390 = vmax.f32 %v373, %v385
  %v391 = vmax.f32 %v374, %v386
  %v392 = vmax.f32 %v375, %v383
  %395 = vrot.lane.b32.xlu0 %v312, 32
  %v396 = vpop.permute.xlu0 %395
  %397 = vrot.lane.b32.xlu0 %v314, 32
  %v398 = vpop.permute.xlu0 %397
  %399 = vrot.lane.b32.xlu0 %v353, 32
  %v400 = vpop.permute.xlu0 %399
  %vm401 = vcmask 261120
  %v402 = vsel %vm401, %v396, %v398
  %v403 = vsel %vm401, %v398, %v400
  %v407 = vmax.f32 %v390, %v402
  %v408 = vmax.f32 %v391, %v403
  %v409 = vmax.f32 %v392, %v400
  %v410 = vld [vmem:[%s2] sm:$0xf]
  %412 = vset.pattern.permute.xlu0 0
  %413 = vperm.xlu0 %412, %v410
  %v414 = vpop.permute.xlu0 %413
  %v416 = vadd.f32 %v407, %v414
  %v417 = vadd.f32 %v408, %v414
  %v418 = vadd.f32 %v409, %v414
  %v419 = vadd.f32 %v416, 0.0
  %v420 = vadd.f32 %v417, 0.0
  %v421 = vadd.f32 %v418, 0.0
  %v422 = vmul.f32 %v419, 0.5
  %v423 = vmul.f32 %v420, 0.5
  %v424 = vmul.f32 %v421, 0.5
  %v425 = vadd.f32 %v422, 0.0
  %v426 = vadd.f32 %v423, 0.0
  %v427 = vadd.f32 %v424, 0.0
  %vm428 = vcmp.ge.f32.partialorder %v425, 1.0
  %vm429 = vcmp.ge.f32.partialorder %v426, 1.0
  %vm430 = vcmp.ge.f32.partialorder %v427, 1.0
  %v431 = vsel %vm428, 1, 0
  %v432 = vsel %vm429, 1, 0
  %v433 = vsel %vm430, 1, 0
  %v434 = vcvt.s32.f32 %v431
  %v435 = vcvt.s32.f32 %v432
  %v436 = vcvt.s32.f32 %v433
  %v437 = vpack.c.bf16 %v434, %v434
  %v438 = vpack.c.bf16 %v435, %v435
  %v439 = vpack.c.bf16 %v436, %v436
  %v443 = vcombine.low %v437, %v438
  %v445 = vunpack.c.l.s4 1983009808
  %v446 = vunpack.c.0.s8 %v445
  %v447 = vlaneseq
  %v448 = vshrl.u32 %v447, 7
  %v449 = vsub.s32 %v446, %v448
  %v450 = vrot.slane %v443, %v449
  %v452 = vunpack.c.l.s4 1983009808
  %v453 = vunpack.c.0.s8 %v452
  %v454 = vlaneseq
  %v455 = vshrl.u32 %v454, 7
  %v456 = vsub.s32 %v453, %v455
  %v457 = vrot.slane %v439, %v456
  %v458 = vcombine.low %v450, %v457
  %vm460 = vcmask 1041408
  %vm461 = vcmask 1043458
  %vm462 = vmor %vm461, %vm460
  %vm463 = vcmask 259076
  %vm464 = vmor %vm463, %vm462
  %465 = vst.msk [vmem:[%s3] sm:$0x3f] %vm464, %v458
  %v466 = vsel %vm428, 0.0, %v425
  %v467 = vsel %vm429, 0.0, %v426
  %v468 = vsel %vm430, 0.0, %v427
  %v469 = vmul.f32 %v419, 0.75
  %v470 = vmul.f32 %v420, 0.75
  %v471 = vmul.f32 %v421, 0.75
  %v472 = vadd.f32 %v469, %v416
  %v473 = vadd.f32 %v470, %v417
  %v474 = vadd.f32 %v471, %v418
  %v475 = vsub.f32 %v472, %v466
  %v476 = vsub.f32 %v473, %v467
  %v477 = vsub.f32 %v474, %v468
  %v478 = vmul.f32 %v475, 0.5
  %v479 = vmul.f32 %v476, 0.5
  %v480 = vmul.f32 %v477, 0.5
  %v481 = vadd.f32 %v466, %v478
  %v482 = vadd.f32 %v467, %v479
  %v483 = vadd.f32 %v468, %v480
  %vm484 = vcmp.ge.f32.partialorder %v481, 1.0
  %vm485 = vcmp.ge.f32.partialorder %v482, 1.0
  %vm486 = vcmp.ge.f32.partialorder %v483, 1.0
  %v487 = vsel %vm484, 1, 0
  %v488 = vsel %vm485, 1, 0
  %v489 = vsel %vm486, 1, 0
  %v490 = vcvt.s32.f32 %v487
  %v491 = vcvt.s32.f32 %v488
  %v492 = vcvt.s32.f32 %v489
  %v493 = vpack.c.bf16 %v490, %v490
  %v494 = vpack.c.bf16 %v491, %v491
  %v495 = vpack.c.bf16 %v492, %v492
  %v499 = vcombine.low %v493, %v494
  %v501 = vunpack.c.l.s4 1983009808
  %v502 = vunpack.c.0.s8 %v501
  %v503 = vlaneseq
  %v504 = vshrl.u32 %v503, 7
  %v505 = vsub.s32 %v502, %v504
  %v506 = vrot.slane %v499, %v505
  %v508 = vunpack.c.l.s4 1983009808
  %v509 = vunpack.c.0.s8 %v508
  %v510 = vlaneseq
  %v511 = vshrl.u32 %v510, 7
  %v512 = vsub.s32 %v509, %v511
  %v513 = vrot.slane %v495, %v512
  %v514 = vcombine.low %v506, %v513
  %s516 = scalar_lea.vmem %s3, 6
  %517 = vst.msk [vmem:[%s516] sm:$0x3f] %vm464, %v514
  %v518 = vsel %vm484, 0.0, %v481
  %v519 = vsel %vm485, 0.0, %v482
  %v520 = vsel %vm486, 0.0, %v483
  %v521 = vmul.f32 %v472, 0.75
  %v522 = vmul.f32 %v473, 0.75
  %v523 = vmul.f32 %v474, 0.75
  %v524 = vadd.f32 %v521, %v416
  %v525 = vadd.f32 %v522, %v417
  %v526 = vadd.f32 %v523, %v418
  %v527 = vsub.f32 %v524, %v518
  %v528 = vsub.f32 %v525, %v519
  %v529 = vsub.f32 %v526, %v520
  %v530 = vmul.f32 %v527, 0.5
  %v531 = vmul.f32 %v528, 0.5
  %v532 = vmul.f32 %v529, 0.5
  %v533 = vadd.f32 %v518, %v530
  %v534 = vadd.f32 %v519, %v531
  %v535 = vadd.f32 %v520, %v532
  %vm536 = vcmp.ge.f32.partialorder %v533, 1.0
  %vm537 = vcmp.ge.f32.partialorder %v534, 1.0
  %vm538 = vcmp.ge.f32.partialorder %v535, 1.0
  %v539 = vsel %vm536, 1, 0
  %v540 = vsel %vm537, 1, 0
  %v541 = vsel %vm538, 1, 0
  %v542 = vcvt.s32.f32 %v539
  %v543 = vcvt.s32.f32 %v540
  %v544 = vcvt.s32.f32 %v541
  %v545 = vpack.c.bf16 %v542, %v542
  %v546 = vpack.c.bf16 %v543, %v543
  %v547 = vpack.c.bf16 %v544, %v544
  %v551 = vcombine.low %v545, %v546
  %v553 = vunpack.c.l.s4 1983009808
  %v554 = vunpack.c.0.s8 %v553
  %v555 = vlaneseq
  %v556 = vshrl.u32 %v555, 7
  %v557 = vsub.s32 %v554, %v556
  %v558 = vrot.slane %v551, %v557
  %v560 = vunpack.c.l.s4 1983009808
  %v561 = vunpack.c.0.s8 %v560
  %v562 = vlaneseq
  %v563 = vshrl.u32 %v562, 7
  %v564 = vsub.s32 %v561, %v563
  %v565 = vrot.slane %v547, %v564
  %v566 = vcombine.low %v558, %v565
  %s568 = scalar_lea.vmem %s3, 12
  %569 = vst.msk [vmem:[%s568] sm:$0x3f] %vm464, %v566
  %v570 = vsel %vm536, 0.0, %v533
  %v571 = vsel %vm537, 0.0, %v534
  %v572 = vsel %vm538, 0.0, %v535
  %v573 = vmul.f32 %v524, 0.75
  %v574 = vmul.f32 %v525, 0.75
  %v575 = vmul.f32 %v526, 0.75
  %v576 = vadd.f32 %v573, %v416
  %v577 = vadd.f32 %v574, %v417
  %v578 = vadd.f32 %v575, %v418
  %v579 = vsub.f32 %v576, %v570
  %v580 = vsub.f32 %v577, %v571
  %v581 = vsub.f32 %v578, %v572
  %v582 = vmul.f32 %v579, 0.5
  %v583 = vmul.f32 %v580, 0.5
  %v584 = vmul.f32 %v581, 0.5
  %v585 = vadd.f32 %v570, %v582
  %v586 = vadd.f32 %v571, %v583
  %v587 = vadd.f32 %v572, %v584
  %vm588 = vcmp.ge.f32.partialorder %v585, 1.0
  %vm589 = vcmp.ge.f32.partialorder %v586, 1.0
  %vm590 = vcmp.ge.f32.partialorder %v587, 1.0
  %v591 = vsel %vm588, 1, 0
  %v592 = vsel %vm589, 1, 0
  %v593 = vsel %vm590, 1, 0
  %v594 = vcvt.s32.f32 %v591
  %v595 = vcvt.s32.f32 %v592
  %v596 = vcvt.s32.f32 %v593
  %v597 = vpack.c.bf16 %v594, %v594
  %v598 = vpack.c.bf16 %v595, %v595
  %v599 = vpack.c.bf16 %v596, %v596
  %v603 = vcombine.low %v597, %v598
  %v605 = vunpack.c.l.s4 1983009808
  %v606 = vunpack.c.0.s8 %v605
  %v607 = vlaneseq
  %v608 = vshrl.u32 %v607, 7
  %v609 = vsub.s32 %v606, %v608
  %v610 = vrot.slane %v603, %v609
  %v612 = vunpack.c.l.s4 1983009808
  %v613 = vunpack.c.0.s8 %v612
  %v614 = vlaneseq
  %v615 = vshrl.u32 %v614, 7
  %v616 = vsub.s32 %v613, %v615
  %v617 = vrot.slane %v599, %v616
  %v618 = vcombine.low %v610, %v617
  %s620 = scalar_lea.vmem %s3, 18
  %621 = vst.msk [vmem:[%s620] sm:$0x3f] %vm464, %v618
  // Predicated region
  $region14: #{casddtp_csnn_forward.2} parent=0 // pred_check
    _
  $region15: #{casddtp_csnn_forward.2} parent=0 // pred_check_branch
    %623 = sbr.rel (0) target = $region17
  $region16: #{casddtp_csnn_forward.2} parent=0 // pred_region
    _
  $region17: #{casddtp_csnn_forward.2} parent=0 // pred_fallthru
    _
  // Predicated region
  $region18: #{casddtp_csnn_forward.2} parent=0 // pred_check
    _
  $region19: #{casddtp_csnn_forward.2} parent=0 // pred_check_branch
    %625 = sbr.rel (0) target = $region21
  $region20: #{casddtp_csnn_forward.2} parent=0 // pred_region
    _
  $region21: #{casddtp_csnn_forward.2} parent=0 // pred_fallthru
    _

// kernel: casddtp_csnn_forward.3
$region0: #{casddtp_csnn_forward.3}
  #allocation0 [shape = 'u32[]', space=smem, size = 0x4, offset = 0x4, fixed_abs, tag = 'smem constant byte address 0x4 - core index']
  #allocation1 [shape = 'u32[144,128]{1,0:T(1,128)}', space=vmem, size = 0x12000, scoped, tag = 'internal scratch']
  #allocation2 [shape = 'f32[8,128]{1,0:T(8,128)}', space=vmem, size = 0x1000, scoped, tag = 'scratch operand']
  %s0 = inlined_call_operand.vmem [shape: bf16[100,512], index: 0, kind: input, shape index: {}]
  %s1 = inlined_call_operand.vmem [shape: bf16[8,100], index: 1, kind: input, shape index: {}]
  %s2 = inlined_call_operand.vmem [shape: f32[8,1], index: 2, kind: input, shape index: {}]
  %s3 = inlined_call_operand.vmem [shape: bf16[128,10], index: 3, kind: input, shape index: {}]
  %s4 = inlined_call_operand.vmem [shape: f32[1,10], index: 4, kind: input, shape index: {}]
  %s5 = inlined_call_operand.vmem [shape: f32[2,10], index: 5, kind: output, shape index: {}]
  %s6 = sld [smem:[#allocation0]]
  $region30: #{casddtp_csnn_forward.3} parent=0
    _
  %s8 = ssub.s32 1, %s6
  %s9 = scalar_select 0, %s8, %s6
  // Predicated region
  $region2: #{casddtp_csnn_forward.3} parent=0 // pred_check
    _
  $region3: #{casddtp_csnn_forward.3} parent=0 // pred_check_branch
    %11 = sbr.rel (0) target = $region5
  $region4: #{casddtp_csnn_forward.3} parent=0 // pred_region
    _
  $region5: #{casddtp_csnn_forward.3} parent=0 // pred_fallthru
    _
  // Predicated region
  $region6: #{casddtp_csnn_forward.3} parent=0 // pred_check
    _
  $region7: #{casddtp_csnn_forward.3} parent=0 // pred_check_branch
    %13 = sbr.rel (0) target = $region9
  $region8: #{casddtp_csnn_forward.3} parent=0 // pred_region
    _
  $region9: #{casddtp_csnn_forward.3} parent=0 // pred_fallthru
    _
  // Predicated region
  $region10: #{casddtp_csnn_forward.3} parent=0 // pred_check
    _
  $region11: #{casddtp_csnn_forward.3} parent=0 // pred_check_branch
    %15 = sbr.rel (0) target = $region13
  $region12: #{casddtp_csnn_forward.3} parent=0 // pred_region
    _
  $region13: #{casddtp_csnn_forward.3} parent=0 // pred_fallthru
    _
  // Predicated region
  $region14: #{casddtp_csnn_forward.3} parent=0 // pred_check
    _
  $region15: #{casddtp_csnn_forward.3} parent=0 // pred_check_branch
    %17 = sbr.rel (0) target = $region17
  $region16: #{casddtp_csnn_forward.3} parent=0 // pred_region
    _
  $region17: #{casddtp_csnn_forward.3} parent=0 // pred_fallthru
    _
  // Predicated region
  $region18: #{casddtp_csnn_forward.3} parent=0 // pred_check
    _
  $region19: #{casddtp_csnn_forward.3} parent=0 // pred_check_branch
    %19 = sbr.rel (0) target = $region21
  $region20: #{casddtp_csnn_forward.3} parent=0 // pred_region
    _
  $region21: #{casddtp_csnn_forward.3} parent=0 // pred_fallthru
    _
  %v21 = vld [vmem:[%s1] sm:$0xf]
  %v22 = vld [vmem:[%s0] sm:$0xff]
  %v23 = vld [vmem:[%s0 + $0x8] sm:$0xff]
  %v24 = vld [vmem:[%s0 + $0x10] sm:$0xff]
  %v25 = vld [vmem:[%s0 + $0x18] sm:$0xff]
  %v26 = vld [vmem:[%s0 + $0x20] sm:$0xff]
  %v27 = vld [vmem:[%s0 + $0x28] sm:$0xff]
  %v28 = vld [vmem:[%s0 + $0x30] sm:$0xff]
  %v29 = vld [vmem:[%s0 + $0x38] sm:$0xff]
  %v30 = vld [vmem:[%s0 + $0x40] sm:$0xff]
  %v31 = vld [vmem:[%s0 + $0x48] sm:$0xff]
  %v32 = vld [vmem:[%s0 + $0x50] sm:$0xff]
  %v33 = vld [vmem:[%s0 + $0x58] sm:$0xff]
  %v34 = vld [vmem:[%s0 + $0x60] sm:$0xff]
  %v35 = vld [vmem:[%s0 + $0x68] sm:$0xff]
  %v36 = vld [vmem:[%s0 + $0x70] sm:$0xff]
  %v37 = vld [vmem:[%s0 + $0x78] sm:$0xff]
  %v38 = vld [vmem:[%s0 + $0x80] sm:$0xff]
  %v39 = vld [vmem:[%s0 + $0x88] sm:$0xff]
  %v40 = vld [vmem:[%s0 + $0x90] sm:$0xff]
  %v41 = vld [vmem:[%s0 + $0x98] sm:$0xff]
  %v42 = vld [vmem:[%s0 + $0xa0] sm:$0xff]
  %v43 = vld [vmem:[%s0 + $0xa8] sm:$0xff]
  %v44 = vld [vmem:[%s0 + $0xb0] sm:$0xff]
  %v45 = vld [vmem:[%s0 + $0xb8] sm:$0xff]
  %v46 = vld [vmem:[%s0 + $0xc0] sm:$0x33]
  %v47 = vld [vmem:[%s0 + $0xc8] sm:$0x33]
  %v74 = vunpack.c.l.b16 %v22
  %v75 = vunpack.c.h.b16 %v22
  %v76 = vunpack.c.l.b16 %v23
  %v77 = vunpack.c.h.b16 %v23
  %v78 = vunpack.c.l.b16 %v24
  %v79 = vunpack.c.h.b16 %v24
  %v80 = vunpack.c.l.b16 %v25
  %v81 = vunpack.c.h.b16 %v25
  %v82 = vunpack.c.l.b16 %v26
  %v83 = vunpack.c.h.b16 %v26
  %v84 = vunpack.c.l.b16 %v27
  %v85 = vunpack.c.h.b16 %v27
  %v86 = vunpack.c.l.b16 %v28
  %v87 = vunpack.c.h.b16 %v28
  %v88 = vunpack.c.l.b16 %v29
  %v89 = vunpack.c.h.b16 %v29
  %v90 = vunpack.c.l.b16 %v30
  %v91 = vunpack.c.h.b16 %v30
  %v92 = vunpack.c.l.b16 %v31
  %v93 = vunpack.c.h.b16 %v31
  %v94 = vunpack.c.l.b16 %v32
  %v95 = vunpack.c.h.b16 %v32
  %v96 = vunpack.c.l.b16 %v33
  %v97 = vunpack.c.h.b16 %v33
  %v98 = vunpack.c.l.b16 %v34
  %v99 = vunpack.c.h.b16 %v34
  %v100 = vunpack.c.l.b16 %v35
  %v101 = vunpack.c.h.b16 %v35
  %v102 = vunpack.c.l.b16 %v36
  %v103 = vunpack.c.h.b16 %v36
  %v104 = vunpack.c.l.b16 %v37
  %v105 = vunpack.c.h.b16 %v37
  %v106 = vunpack.c.l.b16 %v38
  %v107 = vunpack.c.h.b16 %v38
  %v108 = vunpack.c.l.b16 %v39
  %v109 = vunpack.c.h.b16 %v39
  %v110 = vunpack.c.l.b16 %v40
  %v111 = vunpack.c.h.b16 %v40
  %v112 = vunpack.c.l.b16 %v41
  %v113 = vunpack.c.h.b16 %v41
  %v114 = vunpack.c.l.b16 %v42
  %v115 = vunpack.c.h.b16 %v42
  %v116 = vunpack.c.l.b16 %v43
  %v117 = vunpack.c.h.b16 %v43
  %v118 = vunpack.c.l.b16 %v44
  %v119 = vunpack.c.h.b16 %v44
  %v120 = vunpack.c.l.b16 %v45
  %v121 = vunpack.c.h.b16 %v45
  %v122 = vunpack.c.l.b16 %v46
  %v123 = vunpack.c.h.b16 %v46
  %v124 = vunpack.c.l.b16 %v47
  %v125 = vunpack.c.h.b16 %v47
  %v126 = vpack.c.b16 %v78, %v74
  %v127 = vpack.c.b16 %v79, %v75
  %v128 = vpack.c.b16 %v80, %v76
  %v129 = vpack.c.b16 %v81, %v77
  %v130 = vpack.c.b16 %v86, %v82
  %v131 = vpack.c.b16 %v87, %v83
  %v132 = vpack.c.b16 %v88, %v84
  %v133 = vpack.c.b16 %v89, %v85
  %v134 = vpack.c.b16 %v94, %v90
  %v135 = vpack.c.b16 %v95, %v91
  %v136 = vpack.c.b16 %v96, %v92
  %v137 = vpack.c.b16 %v97, %v93
  %v138 = vpack.c.b16 %v102, %v98
  %v139 = vpack.c.b16 %v103, %v99
  %v140 = vpack.c.b16 %v104, %v100
  %v141 = vpack.c.b16 %v105, %v101
  %v142 = vpack.c.b16 %v110, %v106
  %v143 = vpack.c.b16 %v111, %v107
  %v144 = vpack.c.b16 %v112, %v108
  %v145 = vpack.c.b16 %v113, %v109
  %v146 = vpack.c.b16 %v118, %v114
  %v147 = vpack.c.b16 %v119, %v115
  %v148 = vpack.c.b16 %v120, %v116
  %v149 = vpack.c.b16 %v121, %v117
  %v150 = vpack.c.b16 %v122, %v122
  %v151 = vpack.c.b16 %v123, %v123
  %v152 = vpack.c.b16 %v124, %v124
  %v153 = vpack.c.b16 %v125, %v125
  %vm178 = vcmask 818176
  %v180 = vsel %vm178, %v21, 0
  %vm182 = vcmask 1041408
  %v184 = vsel %vm182, %v150, 0
  %v187 = vsel %vm182, %v151, 0
  %v190 = vsel %vm182, %v152, 0
  %v193 = vsel %vm182, %v153, 0
  %195 = vmatprep.subr.bf16.mxu0 %v127
  %196 = vmatpush1.bf16.msra.mxu0 %v126
  %197 = vmatprep.subr.bf16.mxu0 %v131
  %198 = vmatpush1.bf16.msra.mxu0 %v130
  %199 = vmatprep.subr.bf16.mxu0 %v135
  %200 = vmatpush1.bf16.msra.mxu0 %v134
  %201 = vmatprep.subr.bf16.mxu0 %v139
  %202 = vmatpush1.bf16.msra.mxu0 %v138
  %203 = vmatprep.subr.bf16.mxu0 %v143
  %204 = vmatpush1.bf16.msra.mxu0 %v142
  %205 = vmatprep.subr.bf16.mxu0 %v147
  %206 = vmatpush1.bf16.msra.mxu0 %v146
  %207 = vmatprep.subr.bf16.mxu0 %v187
  %208 = vmatpush1.bf16.msra.mxu0 %v184
  %209 = vmatprep.subr.bf16.mxu0 0
  %210 = vmatpush1.bf16.msra.mxu0 0
  %211 = vmatprep.subr.bf16.mxu0 0
  %212 = vmatpush1.bf16.msra.mxu0 0
  %213 = vmatprep.subr.bf16.mxu0 0
  %214 = vmatpush1.bf16.msra.mxu0 0
  %215 = vmatprep.subr.bf16.mxu0 0
  %216 = vmatpush1.bf16.msra.mxu0 0
  %217 = vmatprep.subr.bf16.mxu0 0
  %218 = vmatpush1.bf16.msra.mxu0 0
  %219 = vmatprep.subr.bf16.mxu0 0
  %220 = vmatpush1.bf16.msra.mxu0 0
  %221 = vmatprep.subr.bf16.mxu0 0
  %222 = vmatpush1.bf16.msra.mxu0 0
  %223 = vmatprep.subr.bf16.mxu0 0
  %224 = vmatpush1.bf16.msra.mxu0 0
  %225 = vmatprep.subr.bf16.mxu0 0
  %226 = vmatpush1.bf16.msra.mxu0 0
  %227 = vmatprep.mubr.bf16.mxu0 0
  %228 = vmatmul.mubr.bf16.gmra.mrb[0].mxu0 %v180
  %v229 = vpop.f32.mrb[0].mxu0
  %v230 = vadd.f32 0.0, %v229
  %v231 = vpop.f32.mrb[0].mxu0
  %v232 = vadd.f32 0.0, %v231
  %v233 = vpop.f32.mrb[0].mxu0
  %v234 = vpop.f32.mrb[0].mxu0
  %235 = vdwg.mxu0
  %236 = vmatprep.subr.bf16.mxu0 %v129
  %237 = vmatpush1.bf16.msra.mxu0 %v128
  %238 = vmatprep.subr.bf16.mxu0 %v133
  %239 = vmatpush1.bf16.msra.mxu0 %v132
  %240 = vmatprep.subr.bf16.mxu0 %v137
  %241 = vmatpush1.bf16.msra.mxu0 %v136
  %242 = vmatprep.subr.bf16.mxu0 %v141
  %243 = vmatpush1.bf16.msra.mxu0 %v140
  %244 = vmatprep.subr.bf16.mxu0 %v145
  %245 = vmatpush1.bf16.msra.mxu0 %v144
  %246 = vmatprep.subr.bf16.mxu0 %v149
  %247 = vmatpush1.bf16.msra.mxu0 %v148
  %248 = vmatprep.subr.bf16.mxu0 %v193
  %249 = vmatpush1.bf16.msra.mxu0 %v190
  %250 = vmatprep.subr.bf16.mxu0 0
  %251 = vmatpush1.bf16.msra.mxu0 0
  %252 = vmatprep.subr.bf16.mxu0 0
  %253 = vmatpush1.bf16.msra.mxu0 0
  %254 = vmatprep.subr.bf16.mxu0 0
  %255 = vmatpush1.bf16.msra.mxu0 0
  %256 = vmatprep.subr.bf16.mxu0 0
  %257 = vmatpush1.bf16.msra.mxu0 0
  %258 = vmatprep.subr.bf16.mxu0 0
  %259 = vmatpush1.bf16.msra.mxu0 0
  %260 = vmatprep.subr.bf16.mxu0 0
  %261 = vmatpush1.bf16.msra.mxu0 0
  %262 = vmatprep.subr.bf16.mxu0 0
  %263 = vmatpush1.bf16.msra.mxu0 0
  %264 = vmatprep.subr.bf16.mxu0 0
  %265 = vmatpush1.bf16.msra.mxu0 0
  %266 = vmatprep.subr.bf16.mxu0 0
  %267 = vmatpush1.bf16.msra.mxu0 0
  %268 = vmatprep.mubr.bf16.mxu0 0
  %269 = vmatmul.mubr.bf16.gmra.mrb[0].mxu0 %v180
  %v270 = vpop.f32.mrb[0].mxu0
  %v271 = vadd.f32 0.0, %v270
  %v272 = vpop.f32.mrb[0].mxu0
  %v273 = vadd.f32 0.0, %v272
  %v274 = vpop.f32.mrb[0].mxu0
  %v275 = vpop.f32.mrb[0].mxu0
  %276 = vdwg.mxu0
  %278 = vrot.lane.b32.xlu0 %v230, 96
  %v279 = vpop.permute.xlu0 %278
  %v281 = vmax.f32 %v230, %v279
  %282 = vrot.lane.b32.xlu0 %v230, 64
  %v283 = vpop.permute.xlu0 %282
  %v285 = vmax.f32 %v281, %v283
  %286 = vrot.lane.b32.xlu0 %v230, 32
  %v287 = vpop.permute.xlu0 %286
  %v289 = vmax.f32 %v285, %v287
  %v290 = vld [vmem:[%s2] sm:$0xff]
  %292 = vset.pattern.permute.xlu0 0
  %293 = vperm.xlu0 %292, %v290
  %v294 = vpop.permute.xlu0 %293
  %v296 = vadd.f32 %v289, %v294
  %v297 = vadd.f32 %v296, 0.0
  %v298 = vmul.f32 %v297, 0.5
  %v299 = vadd.f32 %v298, 0.0
  %vm300 = vcmp.ge.f32.partialorder %v299, 1.0
  %v301 = vsel %vm300, 1, 0
  %v302 = vcvt.s32.f32 %v301
  %v303 = vsel %vm300, 0.0, %v299
  %vm304 = vcmask 122880
  %305 = vst.msk [vmem:[#allocation2] sm:$0x1] %vm304, %v302
  %307 = vrot.lane.b32.xlu0 %v302, 112
  %v308 = vpop.permute.xlu0 %307
  %310 = vst.msk [vmem:[#allocation2 + $0x1] sm:$0x1] %vm304, %v308
  %311 = vrot.lane.b32.xlu0 %v302, 16
  %v312 = vpop.permute.xlu0 %311
  %vm314 = vcmask 255105
  %315 = vst.msk [vmem:[#allocation2 - $0x1] sm:$0x2] %vm314, %v312
  %316 = vst.msk [vmem:[#allocation2] sm:$0x2] %vm314, %v302
  %317 = vrot.lane.b32.xlu0 %v302, 32
  %v318 = vpop.permute.xlu0 %317
  %vm320 = vcmask 387330
  %321 = vst.msk [vmem:[#allocation2 - $0x2] sm:$0x4] %vm320, %v318
  %322 = vst.msk [vmem:[#allocation2 - $0x1] sm:$0x4] %vm320, %v312
  %323 = vrot.lane.b32.xlu0 %v302, 48
  %v324 = vpop.permute.xlu0 %323
  %vm326 = vcmask 519555
  %327 = vst.msk [vmem:[#allocation2 - $0x3] sm:$0x8] %vm326, %v324
  %328 = vst.msk [vmem:[#allocation2 - $0x2] sm:$0x8] %vm326, %v318
  %329 = vrot.lane.b32.xlu0 %v302, 64
  %v330 = vpop.permute.xlu0 %329
  %vm332 = vcmask 651780
  %333 = vst.msk [vmem:[#allocation2 - $0x4] sm:$0x10] %vm332, %v330
  %334 = vst.msk [vmem:[#allocation2 - $0x3] sm:$0x10] %vm332, %v324
  %335 = vrot.lane.b32.xlu0 %v302, 80
  %v336 = vpop.permute.xlu0 %335
  %vm338 = vcmask 784005
  %339 = vst.msk [vmem:[#allocation2 - $0x5] sm:$0x20] %vm338, %v336
  %340 = vst.msk [vmem:[#allocation2 - $0x4] sm:$0x20] %vm338, %v330
  %341 = vrot.lane.b32.xlu0 %v302, 96
  %v342 = vpop.permute.xlu0 %341
  %vm344 = vcmask 916230
  %345 = vst.msk [vmem:[#allocation2 - $0x6] sm:$0x40] %vm344, %v342
  %346 = vst.msk [vmem:[#allocation2 - $0x5] sm:$0x40] %vm344, %v336
  %vm347 = vcmask 1048455
  %348 = vst.msk [vmem:[#allocation2 - $0x7] sm:$0x80] %vm347, %v308
  %349 = vst.msk [vmem:[#allocation2 - $0x6] sm:$0x80] %vm347, %v342
  %351 = vrot.lane.b32.xlu0 %v232, 96
  %v352 = vpop.permute.xlu0 %351
  %v354 = vmax.f32 %v232, %v352
  %355 = vrot.lane.b32.xlu0 %v232, 64
  %v356 = vpop.permute.xlu0 %355
  %v358 = vmax.f32 %v354, %v356
  %359 = vrot.lane.b32.xlu0 %v232, 32
  %v360 = vpop.permute.xlu0 %359
  %v362 = vmax.f32 %v358, %v360
  %v363 = vld [vmem:[%s2] sm:$0xff]
  %365 = vset.pattern.permute.xlu0 0
  %366 = vperm.xlu0 %365, %v363
  %v367 = vpop.permute.xlu0 %366
  %v369 = vadd.f32 %v362, %v367
  %v370 = vmul.f32 %v297, 0.75
  %v371 = vadd.f32 %v370, %v369
  %v372 = vsub.f32 %v371, %v303
  %v373 = vmul.f32 %v372, 0.5
  %v374 = vadd.f32 %v303, %v373
  %vm375 = vcmp.ge.f32.partialorder %v374, 1.0
  %v376 = vsel %vm375, 1, 0
  %v377 = vcvt.s32.f32 %v376
  %v378 = vsel %vm375, 0.0, %v374
  %379 = vst.msk [vmem:[#allocation2 + $0x2] sm:$0x1] %vm304, %v377
  %381 = vrot.lane.b32.xlu0 %v377, 112
  %v382 = vpop.permute.xlu0 %381
  %384 = vst.msk [vmem:[#allocation2 + $0x3] sm:$0x1] %vm304, %v382
  %385 = vrot.lane.b32.xlu0 %v377, 16
  %v386 = vpop.permute.xlu0 %385
  %388 = vst.msk [vmem:[#allocation2 + $0x1] sm:$0x2] %vm314, %v386
  %389 = vst.msk [vmem:[#allocation2 + $0x2] sm:$0x2] %vm314, %v377
  %390 = vrot.lane.b32.xlu0 %v377, 32
  %v391 = vpop.permute.xlu0 %390
  %393 = vst.msk [vmem:[#allocation2] sm:$0x4] %vm320, %v391
  %394 = vst.msk [vmem:[#allocation2 + $0x1] sm:$0x4] %vm320, %v386
  %395 = vrot.lane.b32.xlu0 %v377, 48
  %v396 = vpop.permute.xlu0 %395
  %398 = vst.msk [vmem:[#allocation2 - $0x1] sm:$0x8] %vm326, %v396
  %399 = vst.msk [vmem:[#allocation2] sm:$0x8] %vm326, %v391
  %400 = vrot.lane.b32.xlu0 %v377, 64
  %v401 = vpop.permute.xlu0 %400
  %403 = vst.msk [vmem:[#allocation2 - $0x2] sm:$0x10] %vm332, %v401
  %404 = vst.msk [vmem:[#allocation2 - $0x1] sm:$0x10] %vm332, %v396
  %405 = vrot.lane.b32.xlu0 %v377, 80
  %v406 = vpop.permute.xlu0 %405
  %408 = vst.msk [vmem:[#allocation2 - $0x3] sm:$0x20] %vm338, %v406
  %409 = vst.msk [vmem:[#allocation2 - $0x2] sm:$0x20] %vm338, %v401
  %410 = vrot.lane.b32.xlu0 %v377, 96
  %v411 = vpop.permute.xlu0 %410
  %413 = vst.msk [vmem:[#allocation2 - $0x4] sm:$0x40] %vm344, %v411
  %414 = vst.msk [vmem:[#allocation2 - $0x3] sm:$0x40] %vm344, %v406
  %415 = vst.msk [vmem:[#allocation2 - $0x5] sm:$0x80] %vm347, %v382
  %416 = vst.msk [vmem:[#allocation2 - $0x4] sm:$0x80] %vm347, %v411
  %418 = vrot.lane.b32.xlu0 %v271, 96
  %v419 = vpop.permute.xlu0 %418
  %v421 = vmax.f32 %v271, %v419
  %422 = vrot.lane.b32.xlu0 %v271, 64
  %v423 = vpop.permute.xlu0 %422
  %v425 = vmax.f32 %v421, %v423
  %426 = vrot.lane.b32.xlu0 %v271, 32
  %v427 = vpop.permute.xlu0 %426
  %v429 = vmax.f32 %v425, %v427
  %v430 = vld [vmem:[%s2] sm:$0xff]
  %432 = vset.pattern.permute.xlu0 0
  %433 = vperm.xlu0 %432, %v430
  %v434 = vpop.permute.xlu0 %433
  %v436 = vadd.f32 %v429, %v434
  %v437 = vmul.f32 %v371, 0.75
  %v438 = vadd.f32 %v437, %v436
  %v439 = vsub.f32 %v438, %v378
  %v440 = vmul.f32 %v439, 0.5
  %v441 = vadd.f32 %v378, %v440
  %vm442 = vcmp.ge.f32.partialorder %v441, 1.0
  %v443 = vsel %vm442, 1, 0
  %v444 = vcvt.s32.f32 %v443
  %v445 = vsel %vm442, 0.0, %v441
  %446 = vst.msk [vmem:[#allocation2 + $0x4] sm:$0x1] %vm304, %v444
  %448 = vrot.lane.b32.xlu0 %v444, 112
  %v449 = vpop.permute.xlu0 %448
  %451 = vst.msk [vmem:[#allocation2 + $0x5] sm:$0x1] %vm304, %v449
  %452 = vrot.lane.b32.xlu0 %v444, 16
  %v453 = vpop.permute.xlu0 %452
  %455 = vst.msk [vmem:[#allocation2 + $0x3] sm:$0x2] %vm314, %v453
  %456 = vst.msk [vmem:[#allocation2 + $0x4] sm:$0x2] %vm314, %v444
  %457 = vrot.lane.b32.xlu0 %v444, 32
  %v458 = vpop.permute.xlu0 %457
  %460 = vst.msk [vmem:[#allocation2 + $0x2] sm:$0x4] %vm320, %v458
  %461 = vst.msk [vmem:[#allocation2 + $0x3] sm:$0x4] %vm320, %v453
  %462 = vrot.lane.b32.xlu0 %v444, 48
  %v463 = vpop.permute.xlu0 %462
  %465 = vst.msk [vmem:[#allocation2 + $0x1] sm:$0x8] %vm326, %v463
  %466 = vst.msk [vmem:[#allocation2 + $0x2] sm:$0x8] %vm326, %v458
  %467 = vrot.lane.b32.xlu0 %v444, 64
  %v468 = vpop.permute.xlu0 %467
  %470 = vst.msk [vmem:[#allocation2] sm:$0x10] %vm332, %v468
  %471 = vst.msk [vmem:[#allocation2 + $0x1] sm:$0x10] %vm332, %v463
  %472 = vrot.lane.b32.xlu0 %v444, 80
  %v473 = vpop.permute.xlu0 %472
  %475 = vst.msk [vmem:[#allocation2 - $0x1] sm:$0x20] %vm338, %v473
  %476 = vst.msk [vmem:[#allocation2] sm:$0x20] %vm338, %v468
  %477 = vrot.lane.b32.xlu0 %v444, 96
  %v478 = vpop.permute.xlu0 %477
  %480 = vst.msk [vmem:[#allocation2 - $0x2] sm:$0x40] %vm344, %v478
  %481 = vst.msk [vmem:[#allocation2 - $0x1] sm:$0x40] %vm344, %v473
  %482 = vst.msk [vmem:[#allocation2 - $0x3] sm:$0x80] %vm347, %v449
  %483 = vst.msk [vmem:[#allocation2 - $0x2] sm:$0x80] %vm347, %v478
  %485 = vrot.lane.b32.xlu0 %v273, 96
  %v486 = vpop.permute.xlu0 %485
  %v488 = vmax.f32 %v273, %v486
  %489 = vrot.lane.b32.xlu0 %v273, 64
  %v490 = vpop.permute.xlu0 %489
  %v492 = vmax.f32 %v488, %v490
  %493 = vrot.lane.b32.xlu0 %v273, 32
  %v494 = vpop.permute.xlu0 %493
  %v496 = vmax.f32 %v492, %v494
  %v497 = vld [vmem:[%s2] sm:$0xff]
  %499 = vset.pattern.permute.xlu0 0
  %500 = vperm.xlu0 %499, %v497
  %v501 = vpop.permute.xlu0 %500
  %v503 = vadd.f32 %v496, %v501
  %v504 = vmul.f32 %v438, 0.75
  %v505 = vadd.f32 %v504, %v503
  %v506 = vsub.f32 %v505, %v445
  %v507 = vmul.f32 %v506, 0.5
  %v508 = vadd.f32 %v445, %v507
  %vm509 = vcmp.ge.f32.partialorder %v508, 1.0
  %v510 = vsel %vm509, 1, 0
  %v511 = vcvt.s32.f32 %v510
  %512 = vst.msk [vmem:[#allocation2 + $0x6] sm:$0x1] %vm304, %v511
  %514 = vrot.lane.b32.xlu0 %v511, 112
  %v515 = vpop.permute.xlu0 %514
  %517 = vst.msk [vmem:[#allocation2 + $0x7] sm:$0x1] %vm304, %v515
  %518 = vrot.lane.b32.xlu0 %v511, 16
  %v519 = vpop.permute.xlu0 %518
  %521 = vst.msk [vmem:[#allocation2 + $0x5] sm:$0x2] %vm314, %v519
  %522 = vst.msk [vmem:[#allocation2 + $0x6] sm:$0x2] %vm314, %v511
  %523 = vrot.lane.b32.xlu0 %v511, 32
  %v524 = vpop.permute.xlu0 %523
  %526 = vst.msk [vmem:[#allocation2 + $0x4] sm:$0x4] %vm320, %v524
  %527 = vst.msk [vmem:[#allocation2 + $0x5] sm:$0x4] %vm320, %v519
  %528 = vrot.lane.b32.xlu0 %v511, 48
  %v529 = vpop.permute.xlu0 %528
  %531 = vst.msk [vmem:[#allocation2 + $0x3] sm:$0x8] %vm326, %v529
  %532 = vst.msk [vmem:[#allocation2 + $0x4] sm:$0x8] %vm326, %v524
  %533 = vrot.lane.b32.xlu0 %v511, 64
  %v534 = vpop.permute.xlu0 %533
  %536 = vst.msk [vmem:[#allocation2 + $0x2] sm:$0x10] %vm332, %v534
  %537 = vst.msk [vmem:[#allocation2 + $0x3] sm:$0x10] %vm332, %v529
  %538 = vrot.lane.b32.xlu0 %v511, 80
  %v539 = vpop.permute.xlu0 %538
  %541 = vst.msk [vmem:[#allocation2 + $0x1] sm:$0x20] %vm338, %v539
  %542 = vst.msk [vmem:[#allocation2 + $0x2] sm:$0x20] %vm338, %v534
  %543 = vrot.lane.b32.xlu0 %v511, 96
  %v544 = vpop.permute.xlu0 %543
  %546 = vst.msk [vmem:[#allocation2] sm:$0x40] %vm344, %v544
  %547 = vst.msk [vmem:[#allocation2 + $0x1] sm:$0x40] %vm344, %v539
  %548 = vst.msk [vmem:[#allocation2 - $0x1] sm:$0x80] %vm347, %v515
  %549 = vst.msk [vmem:[#allocation2] sm:$0x80] %vm347, %v544
  %v550 = vld [vmem:[#allocation2] sm:$0xff]
  %v551 = vpack.c.bf16 %v550, %v550
  %v552 = vld [vmem:[%s3] sm:$0xf]
  %v553 = vld [vmem:[%s3 + $0x4] sm:$0xf]
  %v554 = vld [vmem:[%s3 + $0x8] sm:$0xf]
  %v555 = vld [vmem:[%s3 + $0xc] sm:$0xf]
  %v556 = vld [vmem:[%s3 + $0x10] sm:$0xf]
  %v557 = vld [vmem:[%s3 + $0x14] sm:$0xf]
  %v558 = vld [vmem:[%s3 + $0x18] sm:$0xf]
  %v559 = vld [vmem:[%s3 + $0x1c] sm:$0xf]
  %v560 = vld [vmem:[%s3 + $0x20] sm:$0xf]
  %v561 = vld [vmem:[%s3 + $0x24] sm:$0xf]
  %v562 = vld [vmem:[%s3 + $0x28] sm:$0xf]
  %v563 = vld [vmem:[%s3 + $0x2c] sm:$0xf]
  %v564 = vld [vmem:[%s3 + $0x30] sm:$0xf]
  %v565 = vld [vmem:[%s3 + $0x34] sm:$0xf]
  %v566 = vld [vmem:[%s3 + $0x38] sm:$0xf]
  %v567 = vld [vmem:[%s3 + $0x3c] sm:$0xf]
  %v568 = vld [vmem:[%s4] sm:$0x1]
  %v570 = vlaneseq
  %v571 = vshrl.u32 %v570, 7
  %v572 = vsub.s32 0, %v571
  %v573 = vrot.slane %v568, %v572
  %v591 = vunpack.c.l.b16 %v552
  %v592 = vunpack.c.l.b16 %v553
  %v593 = vunpack.c.l.b16 %v554
  %v594 = vunpack.c.l.b16 %v555
  %v595 = vunpack.c.l.b16 %v556
  %v596 = vunpack.c.l.b16 %v557
  %v597 = vunpack.c.l.b16 %v558
  %v598 = vunpack.c.l.b16 %v559
  %v599 = vunpack.c.l.b16 %v560
  %v600 = vunpack.c.l.b16 %v561
  %v601 = vunpack.c.l.b16 %v562
  %v602 = vunpack.c.l.b16 %v563
  %v603 = vunpack.c.l.b16 %v564
  %v604 = vunpack.c.l.b16 %v565
  %v605 = vunpack.c.l.b16 %v566
  %v606 = vunpack.c.l.b16 %v567
  %v607 = vpack.c.b16 %v592, %v591
  %v608 = vpack.c.b16 %v594, %v593
  %v609 = vpack.c.b16 %v596, %v595
  %v610 = vpack.c.b16 %v598, %v597
  %v611 = vpack.c.b16 %v600, %v599
  %v612 = vpack.c.b16 %v602, %v601
  %v613 = vpack.c.b16 %v604, %v603
  %v614 = vpack.c.b16 %v606, %v605
  %623 = vmatprep.subr.bf16.mxu0 0
  %624 = vmatpush1.bf16.msra.mxu0 %v607
  %625 = vmatprep.subr.bf16.mxu0 0
  %626 = vmatpush1.bf16.msra.mxu0 %v608
  %627 = vmatprep.subr.bf16.mxu0 0
  %628 = vmatpush1.bf16.msra.mxu0 %v609
  %629 = vmatprep.subr.bf16.mxu0 0
  %630 = vmatpush1.bf16.msra.mxu0 %v610
  %631 = vmatprep.subr.bf16.mxu0 0
  %632 = vmatpush1.bf16.msra.mxu0 %v611
  %633 = vmatprep.subr.bf16.mxu0 0
  %634 = vmatpush1.bf16.msra.mxu0 %v612
  %635 = vmatprep.subr.bf16.mxu0 0
  %636 = vmatpush1.bf16.msra.mxu0 %v613
  %637 = vmatprep.subr.bf16.mxu0 0
  %638 = vmatpush1.bf16.msra.mxu0 %v614
  %639 = vmatprep.subr.bf16.mxu0 0
  %640 = vmatpush1.bf16.msra.mxu0 0
  %641 = vmatprep.subr.bf16.mxu0 0
  %642 = vmatpush1.bf16.msra.mxu0 0
  %643 = vmatprep.subr.bf16.mxu0 0
  %644 = vmatpush1.bf16.msra.mxu0 0
  %645 = vmatprep.subr.bf16.mxu0 0
  %646 = vmatpush1.bf16.msra.mxu0 0
  %647 = vmatprep.subr.bf16.mxu0 0
  %648 = vmatpush1.bf16.msra.mxu0 0
  %649 = vmatprep.subr.bf16.mxu0 0
  %650 = vmatpush1.bf16.msra.mxu0 0
  %651 = vmatprep.subr.bf16.mxu0 0
  %652 = vmatpush1.bf16.msra.mxu0 0
  %653 = vmatprep.subr.bf16.mxu0 0
  %654 = vmatpush1.bf16.msra.mxu0 0
  %655 = vmatprep.mubr.bf16.mxu0 0
  %656 = vmatmul.mubr.bf16.gmra.mrb[0].mxu0 %v551
  %v657 = vpop.f32.mrb[0].mxu0
  %v658 = vadd.f32 %v573, %v657
  %v659 = vpop.f32.mrb[0].mxu0
  %v660 = vpop.f32.mrb[0].mxu0
  %v661 = vpop.f32.mrb[0].mxu0
  %662 = vdwg.mxu0
  %v663 = vmul.f32 %v658, 0.5
  %v664 = vadd.f32 %v663, 0.0
  %vm665 = vcmp.ge.f32.partialorder %v664, 1.0
  %v666 = vsel %vm665, 1, 0
  %v667 = vcvt.s32.f32 %v666
  %v668 = vadd.f32 %v667, 0.0
  %v669 = vsel %vm665, 0.0, %v664
  %v671 = vrot.slane %v669, 6
  %v673 = vsub.f32 %v658, %v671
  %v674 = vmul.f32 %v673, 0.5
  %v676 = vrot.slane %v674, 2
  %v678 = vadd.f32 %v669, %v676
  %vm679 = vcmp.ge.f32.partialorder %v678, 1.0
  %v680 = vsel %vm679, 1, 0
  %v681 = vcvt.s32.f32 %v680
  %v682 = vadd.f32 %v668, %v681
  %v683 = vsel %vm679, 0.0, %v678
  %v685 = vrot.slane %v683, 4
  %v687 = vsub.f32 %v658, %v685
  %v688 = vmul.f32 %v687, 0.5
  %v690 = vrot.slane %v688, 4
  %v692 = vadd.f32 %v683, %v690
  %vm693 = vcmp.ge.f32.partialorder %v692, 1.0
  %v694 = vsel %vm693, 1, 0
  %v695 = vcvt.s32.f32 %v694
  %v696 = vadd.f32 %v682, %v695
  %v697 = vsel %vm693, 0.0, %v692
  %v699 = vrot.slane %v697, 2
  %v701 = vsub.f32 %v658, %v699
  %v702 = vmul.f32 %v701, 0.5
  %v704 = vrot.slane %v702, 6
  %v706 = vadd.f32 %v697, %v704
  %vm707 = vcmp.ge.f32.partialorder %v706, 1.0
  %v708 = vsel %vm707, 1, 0
  %v709 = vcvt.s32.f32 %v708
  %v710 = vadd.f32 %v696, %v709
  %v711 = vmul.f32 %v710, 0.25
  %vm712 = vcmask 74752
  %713 = vst.msk [vmem:[%s5] sm:$0x3] %vm712, %v711
  // Predicated region
  $region22: #{casddtp_csnn_forward.3} parent=0 // pred_check
    _
  $region23: #{casddtp_csnn_forward.3} parent=0 // pred_check_branch
    %715 = sbr.rel (0) target = $region25
  $region24: #{casddtp_csnn_forward.3} parent=0 // pred_region
    _
  $region25: #{casddtp_csnn_forward.3} parent=0 // pred_fallthru
    _
  // Predicated region
  $region26: #{casddtp_csnn_forward.3} parent=0 // pred_check
    _
  $region27: #{casddtp_csnn_forward.3} parent=0 // pred_check_branch
    %717 = sbr.rel (0) target = $region29
  $region28: #{casddtp_csnn_forward.3} parent=0 // pred_region
    _
  $region29: #{casddtp_csnn_forward.3} parent=0 // pred_fallthru
    _

</llo_original>
